<compile_context>
chip_gen: v5e
topology: v5e:2x2
jax: 0.10.0
libtpu: 0.0.40
codegen_flags: <defaults>
</compile_context>

<pallas_src>
import functools

import jax
import jax.numpy as jnp
from jax import lax
from jax.experimental import pallas as pl
from jax.experimental.pallas import tpu as pltpu


def _choose_row_tile(ho, w, target_pixels=512):
    """Largest divisor `th` of `ho` whose flattened tile (th*w rows) is <= ~512
    sublanes (measured pipelining sweet spot) and respects the sublane rule
    (th*w % 8 == 0, or th == ho so the block equals the full dim)."""
    cands = [t for t in range(1, ho + 1)
             if ho % t == 0 and ((t * w) % 8 == 0 or t == ho)]
    under = [t for t in cands if t * w <= target_pixels]
    return max(under) if under else min(cands)


def _fused_dwsep_kernel(x_ref, wd_ref, bd_ref, wp_ref, bp_ref, o_ref, *,
                        kh, kw, w, tile_rows, use_mxu):
    # x_ref : (1, (H+1)*W, C)     flattened channels-last input (+1 zero pad row)
    # wd_ref: (kh*kw, C)          depthwise weights, one row per tap
    # bd_ref: (1, C)              depthwise bias
    # wp_ref: (C, nout)           pointwise 1x1 weights
    # bp_ref: (1, nout)           pointwise bias
    # o_ref : (1, tile_rows*W, nout)  channels-last output (cols >= Wo are junk,
    #                                 sliced off by the wrapper)
    r = pl.program_id(1)
    m = tile_rows * w                      # flattened pixels in this tile
    base = r * m                           # first flattened input pixel of tile
    c = x_ref.shape[-1]

    # ---- depthwise: kh*kw broadcasted vector FMAs over the (m, C) tile ----
    acc = jnp.zeros((m, c), dtype=jnp.float32)
    for dh in range(kh):
        for dw in range(kw):
            tap = dh * kw + dw
            win = x_ref[0, pl.ds(base + dh * w + dw, m), :]      # (m, C)
            acc = acc + win * wd_ref[tap:tap + 1, :]             # (1, C) broadcast
    acc = acc + bd_ref[...]                                      # depthwise bias

    # ---- fused pointwise 1x1 conv ----
    if use_mxu:
        y = jnp.dot(acc, wp_ref[...], preferred_element_type=jnp.float32)
    else:
        # C / nout too small to feed the MXU: a few full-width VPU FMAs instead.
        nout = o_ref.shape[-1]
        y = jnp.zeros((m, nout), dtype=jnp.float32)
        for ci in range(c):
            y = y + acc[:, ci:ci + 1] * wp_ref[ci:ci + 1, :]
    y = y + bp_ref[...]

    o_ref[0, :, :] = y.astype(o_ref.dtype)


def depthwise_separable_conv(x, w_dw, b_dw, w_pw, b_pw, *, kpl=1, padding=0):
    """x: (B, nin, H, W) f32 -> (B, nout, Ho, Wo) f32 (PyTorch Conv2d semantics)."""
    B, nin, H, W = x.shape
    C, kh, kw = w_dw.shape                       # C = nin * kpl
    nout = w_pw.shape[0]                         # w_pw: (nout, C)
    assert C == nin * kpl

    if padding:
        x = jnp.pad(x, ((0, 0), (0, 0), (padding, padding), (padding, padding)))
        H += 2 * padding
        W += 2 * padding
    Ho, Wo = H - kh + 1, W - kw + 1

    # ---- channels-last flattened layout (one cheap XLA pass over the input) ----
    x_cl = jnp.transpose(x, (0, 2, 3, 1))                 # (B, H, W, nin)
    if kpl > 1:
        # grouped-conv output channel oc uses input channel oc // kpl
        x_cl = jnp.repeat(x_cl, kpl, axis=-1)             # (B, H, W, C)
    x_flat = x_cl.reshape(B, H * W, C)
    # one extra zero row so the last taps of the last output row stay in-bounds
    x_flat = jnp.pad(x_flat, ((0, 0), (0, W), (0, 0)))
    HWp = (H + 1) * W

    # weights/biases in channels-last, VMEM-friendly shapes
    wd = jnp.transpose(w_dw, (1, 2, 0)).reshape(kh * kw, C)   # (taps, C)
    bd = b_dw.reshape(1, C)
    wp = jnp.transpose(w_pw, (1, 0))                          # (C, nout)
    bp = b_pw.reshape(1, nout)

    tile_rows = _choose_row_tile(Ho, W)
    n_tiles = Ho // tile_rows
    use_mxu = min(C, nout) >= 32          # tiny K/N: skip MXU, use VPU FMAs

    kernel = functools.partial(_fused_dwsep_kernel, kh=kh, kw=kw, w=W,
                               tile_rows=tile_rows, use_mxu=use_mxu)

    out_flat = pl.pallas_call(
        kernel,
        out_shape=jax.ShapeDtypeStruct((B, Ho * W, nout), jnp.float32),
        grid=(B, n_tiles),
        in_specs=[
            # full image resident across the row-tile axis (same block index)
            pl.BlockSpec((1, HWp, C), lambda b, r: (b, 0, 0)),
            pl.BlockSpec(memory_space=pltpu.MemorySpace.VMEM),   # wd (taps, C)
            pl.BlockSpec(memory_space=pltpu.MemorySpace.VMEM),   # bd (1, C)
            pl.BlockSpec(memory_space=pltpu.MemorySpace.VMEM),   # wp (C, nout)
            pl.BlockSpec(memory_space=pltpu.MemorySpace.VMEM),   # bp (1, nout)
        ],
        out_specs=pl.BlockSpec((1, tile_rows * W, nout), lambda b, r: (b, r, 0)),
        compiler_params=pltpu.CompilerParams(
            dimension_semantics=("parallel", "parallel"),
            vmem_limit_bytes=48 * 1024 * 1024,
        ),
    )(x_flat, wd, bd, wp, bp)

    # drop the wrapped columns (j >= Wo) and return NCHW to match the PyTorch API
    out = out_flat.reshape(B, Ho, W, nout)[:, :, :Wo, :]
    return jnp.transpose(out, (0, 3, 1, 2))


def _reference(x, w_dw, b_dw, w_pw, b_pw, *, nin, kpl, padding):
    """Pure-JAX reference matching PyTorch Conv2d(groups=nin) + 1x1 Conv2d."""
    C, kh, kw = w_dw.shape
    nout = w_pw.shape[0]
    dw = lax.conv_general_dilated(
        x, w_dw.reshape(nin * kpl, 1, kh, kw), window_strides=(1, 1),
        padding=[(padding, padding), (padding, padding)],
        dimension_numbers=("NCHW", "OIHW", "NCHW"),
        feature_group_count=nin,
    ) + b_dw[None, :, None, None]
    pw = lax.conv_general_dilated(
        dw, w_pw.reshape(nout, C, 1, 1), window_strides=(1, 1), padding="VALID",
        dimension_numbers=("NCHW", "OIHW", "NCHW"),
    ) + b_pw[None, :, None, None]
    return pw


if __name__ == "__main__":
    def run_case(B, nin, nout, kpl, ksz, padding, H, W, key):
        k_x, k_wd, k_bd, k_wp, k_bp = jax.random.split(key, 5)
        x = jax.random.normal(k_x, (B, nin, H, W), dtype=jnp.float32)
        w_dw = 0.1 * jax.random.normal(k_wd, (nin * kpl, ksz, ksz), dtype=jnp.float32)
        b_dw = 0.1 * jax.random.normal(k_bd, (nin * kpl,), dtype=jnp.float32)
        w_pw = 0.1 * jax.random.normal(k_wp, (nout, nin * kpl), dtype=jnp.float32)
        b_pw = 0.1 * jax.random.normal(k_bp, (nout,), dtype=jnp.float32)

        out = depthwise_separable_conv(x, w_dw, b_dw, w_pw, b_pw,
                                       kpl=kpl, padding=padding)
        out = jax.block_until_ready(out)
        ref = _reference(x, w_dw, b_dw, w_pw, b_pw, nin=nin, kpl=kpl, padding=padding)
        Ho = H + 2 * padding - ksz + 1
        Wo = W + 2 * padding - ksz + 1
        assert out.shape == (B, nout, Ho, Wo), out.shape
        err = float(jnp.max(jnp.abs(out - ref)))
        assert jnp.allclose(out, ref, rtol=1e-3, atol=1e-3), err

    key = jax.random.PRNGKey(0)
    k1, k2 = jax.random.split(key)
    # module defaults: nin=4, nout=8, kpl=1, kernel_size=3, padding=0
    run_case(B=2, nin=4, nout=8, kpl=1, ksz=3, padding=0, H=16, W=16, key=k1)
    # exercise the kpl > 1 and padding > 0 paths as well
    run_case(B=2, nin=4, nout=8, kpl=2, ksz=3, padding=1, H=16, W=16, key=k2)

    print("KERNEL_OK")
</pallas_src>

<mosaic_0001>
module attributes {stable_mosaic.version = 11 : i64} {
  func.func @_fused_dwsep_kernel(%arg0: i32, %arg1: i32, %arg2: memref<1x272x4xf32, #tpu.memory_space<vmem>>, %arg3: memref<9x4xf32, #tpu.memory_space<vmem>>, %arg4: memref<1x4xf32, #tpu.memory_space<vmem>>, %arg5: memref<4x8xf32, #tpu.memory_space<vmem>>, %arg6: memref<1x8xf32, #tpu.memory_space<vmem>>, %arg7: memref<1x224x8xf32, #tpu.memory_space<vmem>>) attributes {dimension_semantics = [#tpu.dimension_semantics<parallel>, #tpu.dimension_semantics<parallel>], iteration_bounds = array<i64: 2, 1>, scalar_prefetch = 0 : i64, scratch_operands = 0 : i64, tpu.core_type = #tpu.core_type<tc>, window_params = [{transform_indices = @transform_0, window_bounds = array<i64: 1, 272, 4>}, {pipeline_mode = #tpu.pipeline_mode<synchronous>, transform_indices = @transform_1, window_bounds = array<i64: 9, 4>}, {pipeline_mode = #tpu.pipeline_mode<synchronous>, transform_indices = @transform_2, window_bounds = array<i64: 1, 4>}, {pipeline_mode = #tpu.pipeline_mode<synchronous>, transform_indices = @transform_3, window_bounds = array<i64: 4, 8>}, {pipeline_mode = #tpu.pipeline_mode<synchronous>, transform_indices = @transform_4, window_bounds = array<i64: 1, 8>}, {transform_indices = @transform_5, window_bounds = array<i64: 1, 224, 8>}]} {
    %c224_i32 = arith.constant 224 : i32
    %0 = arith.muli %arg1, %c224_i32 : i32
    %cst = arith.constant 0.000000e+00 : f32
    %1 = vector.broadcast %cst : f32 to vector<224x4xf32>
    %c0_i32 = arith.constant 0 : i32
    %2 = arith.addi %0, %c0_i32 : i32
    %c0_i32_0 = arith.constant 0 : i32
    %3 = arith.addi %2, %c0_i32_0 : i32
    %c0 = arith.constant 0 : index
    %4 = arith.index_cast %3 : i32 to index
    %c0_1 = arith.constant 0 : index
    %5 = vector.load %arg2[%c0, %4, %c0_1] : memref<1x272x4xf32, #tpu.memory_space<vmem>>, vector<1x224x4xf32>
    %6 = vector.shape_cast %5 : vector<1x224x4xf32> to vector<224x4xf32>
    %c0_2 = arith.constant 0 : index
    %c0_3 = arith.constant 0 : index
    %7 = vector.load %arg3[%c0_2, %c0_3] : memref<9x4xf32, #tpu.memory_space<vmem>>, vector<1x4xf32>
    %8 = vector.broadcast %7 : vector<1x4xf32> to vector<224x4xf32>
    %9 = arith.mulf %6, %8 : vector<224x4xf32>
    %10 = arith.addf %1, %9 : vector<224x4xf32>
    %c0_i32_4 = arith.constant 0 : i32
    %11 = arith.addi %0, %c0_i32_4 : i32
    %c1_i32 = arith.constant 1 : i32
    %12 = arith.addi %11, %c1_i32 : i32
    %c0_5 = arith.constant 0 : index
    %13 = arith.index_cast %12 : i32 to index
    %c0_6 = arith.constant 0 : index
    %14 = vector.load %arg2[%c0_5, %13, %c0_6] : memref<1x272x4xf32, #tpu.memory_space<vmem>>, vector<1x224x4xf32>
    %15 = vector.shape_cast %14 : vector<1x224x4xf32> to vector<224x4xf32>
    %c1 = arith.constant 1 : index
    %c0_7 = arith.constant 0 : index
    %16 = vector.load %arg3[%c1, %c0_7] : memref<9x4xf32, #tpu.memory_space<vmem>>, vector<1x4xf32>
    %17 = vector.broadcast %16 : vector<1x4xf32> to vector<224x4xf32>
    %18 = arith.mulf %15, %17 : vector<224x4xf32>
    %19 = arith.addf %10, %18 : vector<224x4xf32>
    %c0_i32_8 = arith.constant 0 : i32
    %20 = arith.addi %0, %c0_i32_8 : i32
    %c2_i32 = arith.constant 2 : i32
    %21 = arith.addi %20, %c2_i32 : i32
    %c0_9 = arith.constant 0 : index
    %22 = arith.index_cast %21 : i32 to index
    %c0_10 = arith.constant 0 : index
    %23 = vector.load %arg2[%c0_9, %22, %c0_10] : memref<1x272x4xf32, #tpu.memory_space<vmem>>, vector<1x224x4xf32>
    %24 = vector.shape_cast %23 : vector<1x224x4xf32> to vector<224x4xf32>
    %c2 = arith.constant 2 : index
    %c0_11 = arith.constant 0 : index
    %25 = vector.load %arg3[%c2, %c0_11] : memref<9x4xf32, #tpu.memory_space<vmem>>, vector<1x4xf32>
    %26 = vector.broadcast %25 : vector<1x4xf32> to vector<224x4xf32>
    %27 = arith.mulf %24, %26 : vector<224x4xf32>
    %28 = arith.addf %19, %27 : vector<224x4xf32>
    %c16_i32 = arith.constant 16 : i32
    %29 = arith.addi %0, %c16_i32 : i32
    %c0_i32_12 = arith.constant 0 : i32
    %30 = arith.addi %29, %c0_i32_12 : i32
    %c0_13 = arith.constant 0 : index
    %31 = arith.index_cast %30 : i32 to index
    %c0_14 = arith.constant 0 : index
    %32 = vector.load %arg2[%c0_13, %31, %c0_14] : memref<1x272x4xf32, #tpu.memory_space<vmem>>, vector<1x224x4xf32>
    %33 = vector.shape_cast %32 : vector<1x224x4xf32> to vector<224x4xf32>
    %c3 = arith.constant 3 : index
    %c0_15 = arith.constant 0 : index
    %34 = vector.load %arg3[%c3, %c0_15] : memref<9x4xf32, #tpu.memory_space<vmem>>, vector<1x4xf32>
    %35 = vector.broadcast %34 : vector<1x4xf32> to vector<224x4xf32>
    %36 = arith.mulf %33, %35 : vector<224x4xf32>
    %37 = arith.addf %28, %36 : vector<224x4xf32>
    %c16_i32_16 = arith.constant 16 : i32
    %38 = arith.addi %0, %c16_i32_16 : i32
    %c1_i32_17 = arith.constant 1 : i32
    %39 = arith.addi %38, %c1_i32_17 : i32
    %c0_18 = arith.constant 0 : index
    %40 = arith.index_cast %39 : i32 to index
    %c0_19 = arith.constant 0 : index
    %41 = vector.load %arg2[%c0_18, %40, %c0_19] : memref<1x272x4xf32, #tpu.memory_space<vmem>>, vector<1x224x4xf32>
    %42 = vector.shape_cast %41 : vector<1x224x4xf32> to vector<224x4xf32>
    %c4 = arith.constant 4 : index
    %c0_20 = arith.constant 0 : index
    %43 = vector.load %arg3[%c4, %c0_20] : memref<9x4xf32, #tpu.memory_space<vmem>>, vector<1x4xf32>
    %44 = vector.broadcast %43 : vector<1x4xf32> to vector<224x4xf32>
    %45 = arith.mulf %42, %44 : vector<224x4xf32>
    %46 = arith.addf %37, %45 : vector<224x4xf32>
    %c16_i32_21 = arith.constant 16 : i32
    %47 = arith.addi %0, %c16_i32_21 : i32
    %c2_i32_22 = arith.constant 2 : i32
    %48 = arith.addi %47, %c2_i32_22 : i32
    %c0_23 = arith.constant 0 : index
    %49 = arith.index_cast %48 : i32 to index
    %c0_24 = arith.constant 0 : index
    %50 = vector.load %arg2[%c0_23, %49, %c0_24] : memref<1x272x4xf32, #tpu.memory_space<vmem>>, vector<1x224x4xf32>
    %51 = vector.shape_cast %50 : vector<1x224x4xf32> to vector<224x4xf32>
    %c5 = arith.constant 5 : index
    %c0_25 = arith.constant 0 : index
    %52 = vector.load %arg3[%c5, %c0_25] : memref<9x4xf32, #tpu.memory_space<vmem>>, vector<1x4xf32>
    %53 = vector.broadcast %52 : vector<1x4xf32> to vector<224x4xf32>
    %54 = arith.mulf %51, %53 : vector<224x4xf32>
    %55 = arith.addf %46, %54 : vector<224x4xf32>
    %c32_i32 = arith.constant 32 : i32
    %56 = arith.addi %0, %c32_i32 : i32
    %c0_i32_26 = arith.constant 0 : i32
    %57 = arith.addi %56, %c0_i32_26 : i32
    %c0_27 = arith.constant 0 : index
    %58 = arith.index_cast %57 : i32 to index
    %c0_28 = arith.constant 0 : index
    %59 = vector.load %arg2[%c0_27, %58, %c0_28] : memref<1x272x4xf32, #tpu.memory_space<vmem>>, vector<1x224x4xf32>
    %60 = vector.shape_cast %59 : vector<1x224x4xf32> to vector<224x4xf32>
    %c6 = arith.constant 6 : index
    %c0_29 = arith.constant 0 : index
    %61 = vector.load %arg3[%c6, %c0_29] : memref<9x4xf32, #tpu.memory_space<vmem>>, vector<1x4xf32>
    %62 = vector.broadcast %61 : vector<1x4xf32> to vector<224x4xf32>
    %63 = arith.mulf %60, %62 : vector<224x4xf32>
    %64 = arith.addf %55, %63 : vector<224x4xf32>
    %c32_i32_30 = arith.constant 32 : i32
    %65 = arith.addi %0, %c32_i32_30 : i32
    %c1_i32_31 = arith.constant 1 : i32
    %66 = arith.addi %65, %c1_i32_31 : i32
    %c0_32 = arith.constant 0 : index
    %67 = arith.index_cast %66 : i32 to index
    %c0_33 = arith.constant 0 : index
    %68 = vector.load %arg2[%c0_32, %67, %c0_33] : memref<1x272x4xf32, #tpu.memory_space<vmem>>, vector<1x224x4xf32>
    %69 = vector.shape_cast %68 : vector<1x224x4xf32> to vector<224x4xf32>
    %c7 = arith.constant 7 : index
    %c0_34 = arith.constant 0 : index
    %70 = vector.load %arg3[%c7, %c0_34] : memref<9x4xf32, #tpu.memory_space<vmem>>, vector<1x4xf32>
    %71 = vector.broadcast %70 : vector<1x4xf32> to vector<224x4xf32>
    %72 = arith.mulf %69, %71 : vector<224x4xf32>
    %73 = arith.addf %64, %72 : vector<224x4xf32>
    %c32_i32_35 = arith.constant 32 : i32
    %74 = arith.addi %0, %c32_i32_35 : i32
    %c2_i32_36 = arith.constant 2 : i32
    %75 = arith.addi %74, %c2_i32_36 : i32
    %c0_37 = arith.constant 0 : index
    %76 = arith.index_cast %75 : i32 to index
    %c0_38 = arith.constant 0 : index
    %77 = vector.load %arg2[%c0_37, %76, %c0_38] : memref<1x272x4xf32, #tpu.memory_space<vmem>>, vector<1x224x4xf32>
    %78 = vector.shape_cast %77 : vector<1x224x4xf32> to vector<224x4xf32>
    %c8 = arith.constant 8 : index
    %c0_39 = arith.constant 0 : index
    %79 = vector.load %arg3[%c8, %c0_39] : memref<9x4xf32, #tpu.memory_space<vmem>>, vector<1x4xf32>
    %80 = vector.broadcast %79 : vector<1x4xf32> to vector<224x4xf32>
    %81 = arith.mulf %78, %80 : vector<224x4xf32>
    %82 = arith.addf %73, %81 : vector<224x4xf32>
    %c0_40 = arith.constant 0 : index
    %c0_41 = arith.constant 0 : index
    %83 = vector.load %arg4[%c0_40, %c0_41] : memref<1x4xf32, #tpu.memory_space<vmem>>, vector<1x4xf32>
    %84 = vector.broadcast %83 : vector<1x4xf32> to vector<224x4xf32>
    %85 = arith.addf %82, %84 : vector<224x4xf32>
    %cst_42 = arith.constant 0.000000e+00 : f32
    %86 = vector.broadcast %cst_42 : f32 to vector<224x8xf32>
    %87 = vector.extract_strided_slice %85 {offsets = [0, 0], sizes = [224, 1], strides = [1, 1]} : vector<224x4xf32> to vector<224x1xf32>
    %c0_43 = arith.constant 0 : index
    %c0_44 = arith.constant 0 : index
    %88 = vector.load %arg5[%c0_43, %c0_44] : memref<4x8xf32, #tpu.memory_space<vmem>>, vector<1x8xf32>
    %89 = vector.broadcast %87 : vector<224x1xf32> to vector<224x8xf32>
    %90 = vector.broadcast %88 : vector<1x8xf32> to vector<224x8xf32>
    %91 = arith.mulf %89, %90 : vector<224x8xf32>
    %92 = arith.addf %86, %91 : vector<224x8xf32>
    %93 = vector.extract_strided_slice %85 {offsets = [0, 1], sizes = [224, 1], strides = [1, 1]} : vector<224x4xf32> to vector<224x1xf32>
    %c1_45 = arith.constant 1 : index
    %c0_46 = arith.constant 0 : index
    %94 = vector.load %arg5[%c1_45, %c0_46] : memref<4x8xf32, #tpu.memory_space<vmem>>, vector<1x8xf32>
    %95 = vector.broadcast %93 : vector<224x1xf32> to vector<224x8xf32>
    %96 = vector.broadcast %94 : vector<1x8xf32> to vector<224x8xf32>
    %97 = arith.mulf %95, %96 : vector<224x8xf32>
    %98 = arith.addf %92, %97 : vector<224x8xf32>
    %99 = vector.extract_strided_slice %85 {offsets = [0, 2], sizes = [224, 1], strides = [1, 1]} : vector<224x4xf32> to vector<224x1xf32>
    %c2_47 = arith.constant 2 : index
    %c0_48 = arith.constant 0 : index
    %100 = vector.load %arg5[%c2_47, %c0_48] : memref<4x8xf32, #tpu.memory_space<vmem>>, vector<1x8xf32>
    %101 = vector.broadcast %99 : vector<224x1xf32> to vector<224x8xf32>
    %102 = vector.broadcast %100 : vector<1x8xf32> to vector<224x8xf32>
    %103 = arith.mulf %101, %102 : vector<224x8xf32>
    %104 = arith.addf %98, %103 : vector<224x8xf32>
    %105 = vector.extract_strided_slice %85 {offsets = [0, 3], sizes = [224, 1], strides = [1, 1]} : vector<224x4xf32> to vector<224x1xf32>
    %c3_49 = arith.constant 3 : index
    %c0_50 = arith.constant 0 : index
    %106 = vector.load %arg5[%c3_49, %c0_50] : memref<4x8xf32, #tpu.memory_space<vmem>>, vector<1x8xf32>
    %107 = vector.broadcast %105 : vector<224x1xf32> to vector<224x8xf32>
    %108 = vector.broadcast %106 : vector<1x8xf32> to vector<224x8xf32>
    %109 = arith.mulf %107, %108 : vector<224x8xf32>
    %110 = arith.addf %104, %109 : vector<224x8xf32>
    %c0_51 = arith.constant 0 : index
    %c0_52 = arith.constant 0 : index
    %111 = vector.load %arg6[%c0_51, %c0_52] : memref<1x8xf32, #tpu.memory_space<vmem>>, vector<1x8xf32>
    %112 = vector.broadcast %111 : vector<1x8xf32> to vector<224x8xf32>
    %113 = arith.addf %110, %112 : vector<224x8xf32>
    %c0_53 = arith.constant 0 : index
    %c0_54 = arith.constant 0 : index
    %c0_55 = arith.constant 0 : index
    %114 = vector.load %arg7[%c0_53, %c0_54, %c0_55] : memref<1x224x8xf32, #tpu.memory_space<vmem>>, vector<1x224x8xf32>
    %115 = vector.shape_cast %114 : vector<1x224x8xf32> to vector<224x8xf32>
    %116 = vector.shape_cast %113 : vector<224x8xf32> to vector<1x224x8xf32>
    tpu.vector_store %arg7[%c0_53, %c0_54, %c0_55], %116 {strides = array<i32>} : memref<1x224x8xf32, #tpu.memory_space<vmem>>, vector<1x224x8xf32>,
    return
  }
  func.func @transform_0(%arg0: i32, %arg1: i32) -> (i32, i32, i32) {
    %c0_i32 = arith.constant 0 : i32
    %c0_i32_0 = arith.constant 0 : i32
    %c0_i32_1 = arith.constant 0 : i32
    return %arg0, %c0_i32, %c0_i32_0 : i32, i32, i32
  }
  func.func @transform_1(%arg0: i32, %arg1: i32) -> (i32, i32) {
    %c0_i32 = arith.constant 0 : i32
    %c0_i32_0 = arith.constant 0 : i32
    %c0_i32_1 = arith.constant 0 : i32
    return %c0_i32, %c0_i32_0 : i32, i32
  }
  func.func @transform_2(%arg0: i32, %arg1: i32) -> (i32, i32) {
    %c0_i32 = arith.constant 0 : i32
    %c0_i32_0 = arith.constant 0 : i32
    %c0_i32_1 = arith.constant 0 : i32
    return %c0_i32, %c0_i32_0 : i32, i32
  }
  func.func @transform_3(%arg0: i32, %arg1: i32) -> (i32, i32) {
    %c0_i32 = arith.constant 0 : i32
    %c0_i32_0 = arith.constant 0 : i32
    %c0_i32_1 = arith.constant 0 : i32
    return %c0_i32, %c0_i32_0 : i32, i32
  }
  func.func @transform_4(%arg0: i32, %arg1: i32) -> (i32, i32) {
    %c0_i32 = arith.constant 0 : i32
    %c0_i32_0 = arith.constant 0 : i32
    %c0_i32_1 = arith.constant 0 : i32
    return %c0_i32, %c0_i32_0 : i32, i32
  }
  func.func @transform_5(%arg0: i32, %arg1: i32) -> (i32, i32, i32) {
    %c0_i32 = arith.constant 0 : i32
    %c0_i32_0 = arith.constant 0 : i32
    return %arg0, %arg1, %c0_i32 : i32, i32, i32
  }
}

</mosaic_0001>

<llo_original>
// kernel: tpu_custom_call.1
$region0: #{tpu_custom_call.1}
  #allocation0 [shape = 'u32[]', space=smem, size = 0x4, offset = 0x4, fixed_abs, tag = 'smem constant byte address 0x4 - core index']
  #allocation1 [shape = 'u32[72,128]{1,0:T(1,128)}', space=vmem, size = 0x9000, scoped, tag = 'internal scratch']
  %s0 = inlined_call_operand.vmem [shape: f32[2,272,4], index: 0, kind: input, shape index: {}]
  %s1 = inlined_call_operand.vmem [shape: f32[9,4], index: 1, kind: input, shape index: {}]
  %s2 = inlined_call_operand.vmem [shape: f32[1,4], index: 2, kind: input, shape index: {}]
  %s3 = inlined_call_operand.vmem [shape: f32[4,8], index: 3, kind: input, shape index: {}]
  %s4 = inlined_call_operand.vmem [shape: f32[1,8], index: 4, kind: input, shape index: {}]
  %s5 = inlined_call_operand.vmem [shape: f32[2,224,8], index: 5, kind: output, shape index: {}]
  %s6 = sld [smem:[#allocation0]]
  $region53: #{tpu_custom_call.1} parent=0
    _
  %s8 = ssub.s32 1, %s6
  %s9 = scalar_select 0, %s8, %s6
  loop: start=0, step=1, limit=4
  $region2: #{tpu_custom_call.1} parent=0 // loop_pre_header
    _
  $region3: #{tpu_custom_call.1} parent=0 // loop_header
    %s11 = sphi 0, %s15
    %p12 = scmp.ge.s32.totalorder %s11, 4
    %s18 = sphi 0, %s30
    %s19 = sphi 0, %s26
    %s20 = sphi 0, %s18
    %s21 = sphi 0, %s19
    %s22 = sphi 0, %s20
    %s23 = sphi 0, %s21
    %s33 = sphi 0, %s35
    %s36 = sphi 0, %s33
    %s37 = sphi 0, %s36
    %s53 = sphi 0, %s37
    %s57 = sphi 0, %s57
    %s59 = sphi 0, %s57
    %s60 = sphi 0, %s59
    %s74 = sphi 0, %s60
    %s78 = sphi 0, %s78
    %s80 = sphi 0, %s78
    %s81 = sphi 0, %s80
    %s95 = sphi 0, %s81
    %s99 = sphi 0, %s99
    %s101 = sphi 0, %s99
    %s102 = sphi 0, %s101
    %s116 = sphi 0, %s102
    %s120 = sphi 0, %s120
    %s122 = sphi 0, %s120
    %s123 = sphi 0, %s122
    %s137 = sphi 0, %s123
    %s145 = sphi 0, %s147
    %s148 = sphi 0, %s145
    %s149 = sphi 0, %s148
    %s165 = sphi 0, %s149
  $region4: #{tpu_custom_call.1} parent=0 // loop_header_branch
    %14 = sbr.rel (%p12) target = $region8
  $region5: #{tpu_custom_call.1} parent=0 // loop_body
    %s16 = ssub.s32 %s11, 1
    %s17 = ssub.s32 %s11, 2
    %s24 = sadd.s32 1, %s19
    %p25 = scmp.ge.s32.totalorder %s24, 1
    %s26 = scalar_select %p25, 0, %s24
    %s27 = sadd.s32 1, %s18
    %s28 = scalar_select %p25, %s27, %s18
    %p29 = scmp.ge.s32.totalorder %s28, 2
    %s30 = scalar_select %p29, 0, %s28
    %s31 = ssub.s32 %s18, %s30
    %p32 = scmp.eq.s32.totalorder %s31, 0
    %s34 = sadd.s32 %s33, 1
    %s35 = scalar_select %p32, %s33, %s34
    %p38 = pneg %p32
    %p39 = scmp.eq.s32.totalorder %s11, 1
    %p40 = por %p38, %p39
    %p41 = scmp.ne.s32.totalorder %s33, %s36
    %p42 = scmp.eq.s32.totalorder %s11, 0
    %p43 = por %p41, %p42
    %p44 = scmp.ne.s32.totalorder %s33, %s36
    %p45 = scmp.eq.s32.totalorder %s16, 1
    %p46 = por %p44, %p45
    %p47 = scmp.ne.s32.totalorder %s36, %s37
    %p48 = scmp.eq.s32.totalorder %s16, 0
    %p49 = por %p47, %p48
    %p50 = scmp.ne.s32.totalorder %s36, %s37
    %p51 = scmp.eq.s32.totalorder %s17, 1
    %p52 = por %p50, %p51
    %p54 = scmp.ne.s32.totalorder %s37, %s53
    %p55 = scmp.eq.s32.totalorder %s17, 0
    %p56 = por %p54, %p55
    %s58 = sadd.s32 %s57, 1
    %p61 = scmp.eq.s32.totalorder %s11, 1
    %p62 = scmp.ne.s32.totalorder %s57, %s59
    %p63 = scmp.eq.s32.totalorder %s11, 0
    %p64 = por %p62, %p63
    %p65 = scmp.ne.s32.totalorder %s57, %s59
    %p66 = scmp.eq.s32.totalorder %s16, 1
    %p67 = por %p65, %p66
    %p68 = scmp.ne.s32.totalorder %s59, %s60
    %p69 = scmp.eq.s32.totalorder %s16, 0
    %p70 = por %p68, %p69
    %p71 = scmp.ne.s32.totalorder %s59, %s60
    %p72 = scmp.eq.s32.totalorder %s17, 1
    %p73 = por %p71, %p72
    %p75 = scmp.ne.s32.totalorder %s60, %s74
    %p76 = scmp.eq.s32.totalorder %s17, 0
    %p77 = por %p75, %p76
    %s79 = sadd.s32 %s78, 1
    %p82 = scmp.eq.s32.totalorder %s11, 1
    %p83 = scmp.ne.s32.totalorder %s78, %s80
    %p84 = scmp.eq.s32.totalorder %s11, 0
    %p85 = por %p83, %p84
    %p86 = scmp.ne.s32.totalorder %s78, %s80
    %p87 = scmp.eq.s32.totalorder %s16, 1
    %p88 = por %p86, %p87
    %p89 = scmp.ne.s32.totalorder %s80, %s81
    %p90 = scmp.eq.s32.totalorder %s16, 0
    %p91 = por %p89, %p90
    %p92 = scmp.ne.s32.totalorder %s80, %s81
    %p93 = scmp.eq.s32.totalorder %s17, 1
    %p94 = por %p92, %p93
    %p96 = scmp.ne.s32.totalorder %s81, %s95
    %p97 = scmp.eq.s32.totalorder %s17, 0
    %p98 = por %p96, %p97
    %s100 = sadd.s32 %s99, 1
    %p103 = scmp.eq.s32.totalorder %s11, 1
    %p104 = scmp.ne.s32.totalorder %s99, %s101
    %p105 = scmp.eq.s32.totalorder %s11, 0
    %p106 = por %p104, %p105
    %p107 = scmp.ne.s32.totalorder %s99, %s101
    %p108 = scmp.eq.s32.totalorder %s16, 1
    %p109 = por %p107, %p108
    %p110 = scmp.ne.s32.totalorder %s101, %s102
    %p111 = scmp.eq.s32.totalorder %s16, 0
    %p112 = por %p110, %p111
    %p113 = scmp.ne.s32.totalorder %s101, %s102
    %p114 = scmp.eq.s32.totalorder %s17, 1
    %p115 = por %p113, %p114
    %p117 = scmp.ne.s32.totalorder %s102, %s116
    %p118 = scmp.eq.s32.totalorder %s17, 0
    %p119 = por %p117, %p118
    %s121 = sadd.s32 %s120, 1
    %p124 = scmp.eq.s32.totalorder %s11, 1
    %p125 = scmp.ne.s32.totalorder %s120, %s122
    %p126 = scmp.eq.s32.totalorder %s11, 0
    %p127 = por %p125, %p126
    %p128 = scmp.ne.s32.totalorder %s120, %s122
    %p129 = scmp.eq.s32.totalorder %s16, 1
    %p130 = por %p128, %p129
    %p131 = scmp.ne.s32.totalorder %s122, %s123
    %p132 = scmp.eq.s32.totalorder %s16, 0
    %p133 = por %p131, %p132
    %p134 = scmp.ne.s32.totalorder %s122, %s123
    %p135 = scmp.eq.s32.totalorder %s17, 1
    %p136 = por %p134, %p135
    %p138 = scmp.ne.s32.totalorder %s123, %s137
    %p139 = scmp.eq.s32.totalorder %s17, 0
    %p140 = por %p138, %p139
    %s141 = ssub.s32 %s18, %s30
    %s142 = ssub.s32 %s19, %s26
    %s143 = sor.u32 %s141, %s142
    %p144 = scmp.eq.s32.totalorder %s143, 0
    %s146 = sadd.s32 %s145, 1
    %s147 = scalar_select %p144, %s145, %s146
    %p150 = pneg %p144
    %p151 = scmp.eq.s32.totalorder %s11, 1
    %p152 = por %p150, %p151
    %p153 = scmp.ne.s32.totalorder %s145, %s148
    %p154 = scmp.eq.s32.totalorder %s11, 0
    %p155 = por %p153, %p154
    %p156 = scmp.ne.s32.totalorder %s145, %s148
    %p157 = scmp.eq.s32.totalorder %s16, 1
    %p158 = por %p156, %p157
    %p159 = scmp.ne.s32.totalorder %s148, %s149
    %p160 = scmp.eq.s32.totalorder %s16, 0
    %p161 = por %p159, %p160
    %p162 = scmp.ne.s32.totalorder %s148, %s149
    %p163 = scmp.eq.s32.totalorder %s17, 1
    %p164 = por %p162, %p163
    %p166 = scmp.ne.s32.totalorder %s149, %s165
    %p167 = scmp.eq.s32.totalorder %s17, 0
    %p168 = por %p166, %p167
    %p169 = scmp.le.s32.totalorder 1, %s11
    %p170 = scmp.lt.s32.totalorder %s11, 3
    %p171 = pnand %p169, %p170
    %p172 = pneg %p171
    // Predicated region
    $region9: #{tpu_custom_call.1} parent=5 // pred_check
      _
    $region10: #{tpu_custom_call.1} parent=5 // pred_check_branch
      %174 = sbr.rel (%p171) target = $region12
    $region11: #{tpu_custom_call.1} parent=5 // pred_region
      %s175 = ssub.s32 %s11, 1
      // Predicated region
      $region13: #{tpu_custom_call.1} parent=11 // pred_check
        %p176 = pneg %p70
      $region14: #{tpu_custom_call.1} parent=11 // pred_check_branch
        %178 = sbr.rel (%p176) target = $region16
      $region15: #{tpu_custom_call.1} parent=11 // pred_region
        _
      $region16: #{tpu_custom_call.1} parent=11 // pred_fallthru
        _
      // Predicated region
      $region17: #{tpu_custom_call.1} parent=11 // pred_check
        %p179 = pneg %p91
      $region18: #{tpu_custom_call.1} parent=11 // pred_check_branch
        %181 = sbr.rel (%p179) target = $region20
      $region19: #{tpu_custom_call.1} parent=11 // pred_region
        _
      $region20: #{tpu_custom_call.1} parent=11 // pred_fallthru
        _
      // Predicated region
      $region21: #{tpu_custom_call.1} parent=11 // pred_check
        %p182 = pneg %p112
      $region22: #{tpu_custom_call.1} parent=11 // pred_check_branch
        %184 = sbr.rel (%p182) target = $region24
      $region23: #{tpu_custom_call.1} parent=11 // pred_region
        _
      $region24: #{tpu_custom_call.1} parent=11 // pred_fallthru
        _
      // Predicated region
      $region25: #{tpu_custom_call.1} parent=11 // pred_check
        %p185 = pneg %p133
      $region26: #{tpu_custom_call.1} parent=11 // pred_check_branch
        %187 = sbr.rel (%p185) target = $region28
      $region27: #{tpu_custom_call.1} parent=11 // pred_region
        _
      $region28: #{tpu_custom_call.1} parent=11 // pred_fallthru
        _
    $region12: #{tpu_custom_call.1} parent=5 // pred_fallthru
      _
    %p188 = scmp.lt.s32.totalorder %s11, 2
    // Predicated region
    $region29: #{tpu_custom_call.1} parent=5 // pred_check
      %p189 = pneg %p188
    $region30: #{tpu_custom_call.1} parent=5 // pred_check_branch
      %191 = sbr.rel (%p189) target = $region32
    $region31: #{tpu_custom_call.1} parent=5 // pred_region
      // Predicated region
      $region33: #{tpu_custom_call.1} parent=31 // pred_check
        %p192 = pneg %p43
      $region34: #{tpu_custom_call.1} parent=31 // pred_check_branch
        %194 = sbr.rel (%p192) target = $region36
      $region35: #{tpu_custom_call.1} parent=31 // pred_region
        %p195 = scmp.lt.s32.totalorder %s18, 1
        %s196 = scalar_select %p195, %s18, 1
        %s197 = smul.addr %s196, 34
        %s198 = smul.addr %s197, 8
        %s199 = scalar_lea.vmem %s0, %s198
      $region36: #{tpu_custom_call.1} parent=31 // pred_fallthru
        _
    $region32: #{tpu_custom_call.1} parent=5 // pred_fallthru
      _
    %p200 = scmp.le.s32.totalorder 1, %s11
    %p201 = scmp.lt.s32.totalorder %s11, 3
    %p202 = pnand %p200, %p201
    %p203 = pneg %p202
    // Predicated region
    $region37: #{tpu_custom_call.1} parent=5 // pred_check
      _
    $region38: #{tpu_custom_call.1} parent=5 // pred_check_branch
      %205 = sbr.rel (%p202) target = $region40
    $region39: #{tpu_custom_call.1} parent=5 // pred_region
      %s206 = ssub.s32 %s11, 1
      %p207 = scmp.lt.s32.totalorder %s20, 1
      %s208 = scalar_select %p207, %s20, 1
      %s209 = smul.addr %s208, 34
      %s210 = smul.addr %s209, 8
      %s211 = scalar_lea.vmem %s0, %s210
      %p212 = pneg %p49
      %p213 = pneg %p46
      %p214 = pneg %p70
      %p215 = pneg %p67
      %p216 = pneg %p91
      %p217 = pneg %p88
      %p218 = pneg %p112
      %p219 = pneg %p109
      %p220 = pneg %p133
      %p221 = pneg %p130
      %p222 = pneg %p161
      %p223 = pneg %p158
      %s224 = smul.u32 28, %s21
      %p225 = scmp.lt.s32.totalorder %s20, 1
      %s226 = scalar_select %p225, %s20, 1
      %p227 = scmp.lt.s32.totalorder %s224, 27
      %s228 = scalar_select %p227, %s224, 27
      %s229 = smul.addr %s226, 28
      %s230 = sadd.s32 %s228, %s229
      %s231 = smul.addr %s230, 8
      %s232 = scalar_lea.vmem %s5, %s231
      %p233 = scmp.lt.s32.totalorder %s20, 1
      %s234 = scalar_select %p233, %s20, 1
      %s235 = smul.addr %s234, 34
      %s236 = smul.addr %s235, 8
      %s237 = scalar_lea.vmem %s0, %s236
      %s238 = smul.u32 28, %s21
      %p239 = scmp.lt.s32.totalorder %s20, 1
      %s240 = scalar_select %p239, %s20, 1
      %p241 = scmp.lt.s32.totalorder %s238, 27
      %s242 = scalar_select %p241, %s238, 27
      %s243 = smul.addr %s240, 28
      %s244 = sadd.s32 %s242, %s243
      %s245 = smul.addr %s244, 8
      %s246 = scalar_lea.vmem %s5, %s245
      %s247 = smul.u32 28, %s21
      %s248 = smul.u32 %s21, 224
      %s249 = scalar_lea.vmem %s237, %s248
      %v250 = vld [vmem:[%s249] sm:$0xff]
      %v251 = vld [vmem:[%s249 + $0x8] sm:$0xff]
      %v252 = vld [vmem:[%s249 + $0x10] sm:$0xff]
      %v253 = vld [vmem:[%s249 + $0x18] sm:$0xff]
      %v254 = vld [vmem:[%s249 + $0x20] sm:$0xff]
      %v255 = vld [vmem:[%s249 + $0x28] sm:$0xff]
      %v256 = vld [vmem:[%s249 + $0x30] sm:$0xff]
      %v257 = vld [vmem:[%s249 + $0x38] sm:$0xff]
      %v258 = vld [vmem:[%s249 + $0x40] sm:$0xff]
      %v259 = vld [vmem:[%s249 + $0x48] sm:$0xff]
      %v260 = vld [vmem:[%s249 + $0x50] sm:$0xff]
      %v261 = vld [vmem:[%s249 + $0x58] sm:$0xff]
      %v262 = vld [vmem:[%s249 + $0x60] sm:$0xff]
      %v263 = vld [vmem:[%s249 + $0x68] sm:$0xff]
      %v264 = vld [vmem:[%s249 + $0x70] sm:$0xff]
      %v265 = vld [vmem:[%s249 + $0x78] sm:$0xff]
      %v266 = vld [vmem:[%s249 + $0x80] sm:$0xff]
      %v267 = vld [vmem:[%s249 + $0x88] sm:$0xff]
      %v268 = vld [vmem:[%s249 + $0x90] sm:$0xff]
      %v269 = vld [vmem:[%s249 + $0x98] sm:$0xff]
      %v270 = vld [vmem:[%s249 + $0xa0] sm:$0xff]
      %v271 = vld [vmem:[%s249 + $0xa8] sm:$0xff]
      %v272 = vld [vmem:[%s249 + $0xb0] sm:$0xff]
      %v273 = vld [vmem:[%s249 + $0xb8] sm:$0xff]
      %v274 = vld [vmem:[%s249 + $0xc0] sm:$0xff]
      %v275 = vld [vmem:[%s249 + $0xc8] sm:$0xff]
      %v276 = vld [vmem:[%s249 + $0xd0] sm:$0xff]
      %v277 = vld [vmem:[%s249 + $0xd8] sm:$0xff]
      %v278 = vld [vmem:[%s1] sm:$0x1]
      %v279 = vperm.slane %v278, 0
      %v280 = vmul.f32 %v250, %v279
      %v281 = vmul.f32 %v251, %v279
      %v282 = vmul.f32 %v252, %v279
      %v283 = vmul.f32 %v253, %v279
      %v284 = vmul.f32 %v254, %v279
      %v285 = vmul.f32 %v255, %v279
      %v286 = vmul.f32 %v256, %v279
      %v287 = vmul.f32 %v257, %v279
      %v288 = vmul.f32 %v258, %v279
      %v289 = vmul.f32 %v259, %v279
      %v290 = vmul.f32 %v260, %v279
      %v291 = vmul.f32 %v261, %v279
      %v292 = vmul.f32 %v262, %v279
      %v293 = vmul.f32 %v263, %v279
      %v294 = vmul.f32 %v264, %v279
      %v295 = vmul.f32 %v265, %v279
      %v296 = vmul.f32 %v266, %v279
      %v297 = vmul.f32 %v267, %v279
      %v298 = vmul.f32 %v268, %v279
      %v299 = vmul.f32 %v269, %v279
      %v300 = vmul.f32 %v270, %v279
      %v301 = vmul.f32 %v271, %v279
      %v302 = vmul.f32 %v272, %v279
      %v303 = vmul.f32 %v273, %v279
      %v304 = vmul.f32 %v274, %v279
      %v305 = vmul.f32 %v275, %v279
      %v306 = vmul.f32 %v276, %v279
      %v307 = vmul.f32 %v277, %v279
      %v308 = vadd.f32 %v280, 0.0
      %v309 = vadd.f32 %v281, 0.0
      %v310 = vadd.f32 %v282, 0.0
      %v311 = vadd.f32 %v283, 0.0
      %v312 = vadd.f32 %v284, 0.0
      %v313 = vadd.f32 %v285, 0.0
      %v314 = vadd.f32 %v286, 0.0
      %v315 = vadd.f32 %v287, 0.0
      %v316 = vadd.f32 %v288, 0.0
      %v317 = vadd.f32 %v289, 0.0
      %v318 = vadd.f32 %v290, 0.0
      %v319 = vadd.f32 %v291, 0.0
      %v320 = vadd.f32 %v292, 0.0
      %v321 = vadd.f32 %v293, 0.0
      %v322 = vadd.f32 %v294, 0.0
      %v323 = vadd.f32 %v295, 0.0
      %v324 = vadd.f32 %v296, 0.0
      %v325 = vadd.f32 %v297, 0.0
      %v326 = vadd.f32 %v298, 0.0
      %v327 = vadd.f32 %v299, 0.0
      %v328 = vadd.f32 %v300, 0.0
      %v329 = vadd.f32 %v301, 0.0
      %v330 = vadd.f32 %v302, 0.0
      %v331 = vadd.f32 %v303, 0.0
      %v332 = vadd.f32 %v304, 0.0
      %v333 = vadd.f32 %v305, 0.0
      %v334 = vadd.f32 %v306, 0.0
      %v335 = vadd.f32 %v307, 0.0
      %s336 = sadd.s32 %s248, 1
      %s337 = scalar_lea.vmem %s237, %s336
      %v338 = vld [vmem:[%s337] sm:$0xff]
      %v339 = vld [vmem:[%s337 + $0x8] sm:$0xff]
      %v340 = vld [vmem:[%s337 + $0x10] sm:$0xff]
      %v341 = vld [vmem:[%s337 + $0x18] sm:$0xff]
      %v342 = vld [vmem:[%s337 + $0x20] sm:$0xff]
      %v343 = vld [vmem:[%s337 + $0x28] sm:$0xff]
      %v344 = vld [vmem:[%s337 + $0x30] sm:$0xff]
      %v345 = vld [vmem:[%s337 + $0x38] sm:$0xff]
      %v346 = vld [vmem:[%s337 + $0x40] sm:$0xff]
      %v347 = vld [vmem:[%s337 + $0x48] sm:$0xff]
      %v348 = vld [vmem:[%s337 + $0x50] sm:$0xff]
      %v349 = vld [vmem:[%s337 + $0x58] sm:$0xff]
      %v350 = vld [vmem:[%s337 + $0x60] sm:$0xff]
      %v351 = vld [vmem:[%s337 + $0x68] sm:$0xff]
      %v352 = vld [vmem:[%s337 + $0x70] sm:$0xff]
      %v353 = vld [vmem:[%s337 + $0x78] sm:$0xff]
      %v354 = vld [vmem:[%s337 + $0x80] sm:$0xff]
      %v355 = vld [vmem:[%s337 + $0x88] sm:$0xff]
      %v356 = vld [vmem:[%s337 + $0x90] sm:$0xff]
      %v357 = vld [vmem:[%s337 + $0x98] sm:$0xff]
      %v358 = vld [vmem:[%s337 + $0xa0] sm:$0xff]
      %v359 = vld [vmem:[%s337 + $0xa8] sm:$0xff]
      %v360 = vld [vmem:[%s337 + $0xb0] sm:$0xff]
      %v361 = vld [vmem:[%s337 + $0xb8] sm:$0xff]
      %v362 = vld [vmem:[%s337 + $0xc0] sm:$0xff]
      %v363 = vld [vmem:[%s337 + $0xc8] sm:$0xff]
      %v364 = vld [vmem:[%s337 + $0xd0] sm:$0xff]
      %v365 = vld [vmem:[%s337 + $0xd8] sm:$0xff]
      %v366 = vld [vmem:[%s1 + $0x1] sm:$0x1]
      %v367 = vperm.slane %v366, 0
      %v368 = vmul.f32 %v338, %v367
      %v369 = vmul.f32 %v339, %v367
      %v370 = vmul.f32 %v340, %v367
      %v371 = vmul.f32 %v341, %v367
      %v372 = vmul.f32 %v342, %v367
      %v373 = vmul.f32 %v343, %v367
      %v374 = vmul.f32 %v344, %v367
      %v375 = vmul.f32 %v345, %v367
      %v376 = vmul.f32 %v346, %v367
      %v377 = vmul.f32 %v347, %v367
      %v378 = vmul.f32 %v348, %v367
      %v379 = vmul.f32 %v349, %v367
      %v380 = vmul.f32 %v350, %v367
      %v381 = vmul.f32 %v351, %v367
      %v382 = vmul.f32 %v352, %v367
      %v383 = vmul.f32 %v353, %v367
      %v384 = vmul.f32 %v354, %v367
      %v385 = vmul.f32 %v355, %v367
      %v386 = vmul.f32 %v356, %v367
      %v387 = vmul.f32 %v357, %v367
      %v388 = vmul.f32 %v358, %v367
      %v389 = vmul.f32 %v359, %v367
      %v390 = vmul.f32 %v360, %v367
      %v391 = vmul.f32 %v361, %v367
      %v392 = vmul.f32 %v362, %v367
      %v393 = vmul.f32 %v363, %v367
      %v394 = vmul.f32 %v364, %v367
      %v395 = vmul.f32 %v365, %v367
      %v396 = vadd.f32 %v308, %v368
      %v397 = vadd.f32 %v309, %v369
      %v398 = vadd.f32 %v310, %v370
      %v399 = vadd.f32 %v311, %v371
      %v400 = vadd.f32 %v312, %v372
      %v401 = vadd.f32 %v313, %v373
      %v402 = vadd.f32 %v314, %v374
      %v403 = vadd.f32 %v315, %v375
      %v404 = vadd.f32 %v316, %v376
      %v405 = vadd.f32 %v317, %v377
      %v406 = vadd.f32 %v318, %v378
      %v407 = vadd.f32 %v319, %v379
      %v408 = vadd.f32 %v320, %v380
      %v409 = vadd.f32 %v321, %v381
      %v410 = vadd.f32 %v322, %v382
      %v411 = vadd.f32 %v323, %v383
      %v412 = vadd.f32 %v324, %v384
      %v413 = vadd.f32 %v325, %v385
      %v414 = vadd.f32 %v326, %v386
      %v415 = vadd.f32 %v327, %v387
      %v416 = vadd.f32 %v328, %v388
      %v417 = vadd.f32 %v329, %v389
      %v418 = vadd.f32 %v330, %v390
      %v419 = vadd.f32 %v331, %v391
      %v420 = vadd.f32 %v332, %v392
      %v421 = vadd.f32 %v333, %v393
      %v422 = vadd.f32 %v334, %v394
      %v423 = vadd.f32 %v335, %v395
      %s424 = sadd.s32 %s248, 2
      %s425 = scalar_lea.vmem %s237, %s424
      %v426 = vld [vmem:[%s425] sm:$0xff]
      %v427 = vld [vmem:[%s425 + $0x8] sm:$0xff]
      %v428 = vld [vmem:[%s425 + $0x10] sm:$0xff]
      %v429 = vld [vmem:[%s425 + $0x18] sm:$0xff]
      %v430 = vld [vmem:[%s425 + $0x20] sm:$0xff]
      %v431 = vld [vmem:[%s425 + $0x28] sm:$0xff]
      %v432 = vld [vmem:[%s425 + $0x30] sm:$0xff]
      %v433 = vld [vmem:[%s425 + $0x38] sm:$0xff]
      %v434 = vld [vmem:[%s425 + $0x40] sm:$0xff]
      %v435 = vld [vmem:[%s425 + $0x48] sm:$0xff]
      %v436 = vld [vmem:[%s425 + $0x50] sm:$0xff]
      %v437 = vld [vmem:[%s425 + $0x58] sm:$0xff]
      %v438 = vld [vmem:[%s425 + $0x60] sm:$0xff]
      %v439 = vld [vmem:[%s425 + $0x68] sm:$0xff]
      %v440 = vld [vmem:[%s425 + $0x70] sm:$0xff]
      %v441 = vld [vmem:[%s425 + $0x78] sm:$0xff]
      %v442 = vld [vmem:[%s425 + $0x80] sm:$0xff]
      %v443 = vld [vmem:[%s425 + $0x88] sm:$0xff]
      %v444 = vld [vmem:[%s425 + $0x90] sm:$0xff]
      %v445 = vld [vmem:[%s425 + $0x98] sm:$0xff]
      %v446 = vld [vmem:[%s425 + $0xa0] sm:$0xff]
      %v447 = vld [vmem:[%s425 + $0xa8] sm:$0xff]
      %v448 = vld [vmem:[%s425 + $0xb0] sm:$0xff]
      %v449 = vld [vmem:[%s425 + $0xb8] sm:$0xff]
      %v450 = vld [vmem:[%s425 + $0xc0] sm:$0xff]
      %v451 = vld [vmem:[%s425 + $0xc8] sm:$0xff]
      %v452 = vld [vmem:[%s425 + $0xd0] sm:$0xff]
      %v453 = vld [vmem:[%s425 + $0xd8] sm:$0xff]
      %v454 = vld [vmem:[%s1 + $0x2] sm:$0x1]
      %v455 = vperm.slane %v454, 0
      %v456 = vmul.f32 %v426, %v455
      %v457 = vmul.f32 %v427, %v455
      %v458 = vmul.f32 %v428, %v455
      %v459 = vmul.f32 %v429, %v455
      %v460 = vmul.f32 %v430, %v455
      %v461 = vmul.f32 %v431, %v455
      %v462 = vmul.f32 %v432, %v455
      %v463 = vmul.f32 %v433, %v455
      %v464 = vmul.f32 %v434, %v455
      %v465 = vmul.f32 %v435, %v455
      %v466 = vmul.f32 %v436, %v455
      %v467 = vmul.f32 %v437, %v455
      %v468 = vmul.f32 %v438, %v455
      %v469 = vmul.f32 %v439, %v455
      %v470 = vmul.f32 %v440, %v455
      %v471 = vmul.f32 %v441, %v455
      %v472 = vmul.f32 %v442, %v455
      %v473 = vmul.f32 %v443, %v455
      %v474 = vmul.f32 %v444, %v455
      %v475 = vmul.f32 %v445, %v455
      %v476 = vmul.f32 %v446, %v455
      %v477 = vmul.f32 %v447, %v455
      %v478 = vmul.f32 %v448, %v455
      %v479 = vmul.f32 %v449, %v455
      %v480 = vmul.f32 %v450, %v455
      %v481 = vmul.f32 %v451, %v455
      %v482 = vmul.f32 %v452, %v455
      %v483 = vmul.f32 %v453, %v455
      %v484 = vadd.f32 %v396, %v456
      %v485 = vadd.f32 %v397, %v457
      %v486 = vadd.f32 %v398, %v458
      %v487 = vadd.f32 %v399, %v459
      %v488 = vadd.f32 %v400, %v460
      %v489 = vadd.f32 %v401, %v461
      %v490 = vadd.f32 %v402, %v462
      %v491 = vadd.f32 %v403, %v463
      %v492 = vadd.f32 %v404, %v464
      %v493 = vadd.f32 %v405, %v465
      %v494 = vadd.f32 %v406, %v466
      %v495 = vadd.f32 %v407, %v467
      %v496 = vadd.f32 %v408, %v468
      %v497 = vadd.f32 %v409, %v469
      %v498 = vadd.f32 %v410, %v470
      %v499 = vadd.f32 %v411, %v471
      %v500 = vadd.f32 %v412, %v472
      %v501 = vadd.f32 %v413, %v473
      %v502 = vadd.f32 %v414, %v474
      %v503 = vadd.f32 %v415, %v475
      %v504 = vadd.f32 %v416, %v476
      %v505 = vadd.f32 %v417, %v477
      %v506 = vadd.f32 %v418, %v478
      %v507 = vadd.f32 %v419, %v479
      %v508 = vadd.f32 %v420, %v480
      %v509 = vadd.f32 %v421, %v481
      %v510 = vadd.f32 %v422, %v482
      %v511 = vadd.f32 %v423, %v483
      %s512 = sadd.s32 %s248, 16
      %s513 = scalar_lea.vmem %s237, %s512
      %v514 = vld [vmem:[%s513] sm:$0xff]
      %v515 = vld [vmem:[%s513 + $0x8] sm:$0xff]
      %v516 = vld [vmem:[%s513 + $0x10] sm:$0xff]
      %v517 = vld [vmem:[%s513 + $0x18] sm:$0xff]
      %v518 = vld [vmem:[%s513 + $0x20] sm:$0xff]
      %v519 = vld [vmem:[%s513 + $0x28] sm:$0xff]
      %v520 = vld [vmem:[%s513 + $0x30] sm:$0xff]
      %v521 = vld [vmem:[%s513 + $0x38] sm:$0xff]
      %v522 = vld [vmem:[%s513 + $0x40] sm:$0xff]
      %v523 = vld [vmem:[%s513 + $0x48] sm:$0xff]
      %v524 = vld [vmem:[%s513 + $0x50] sm:$0xff]
      %v525 = vld [vmem:[%s513 + $0x58] sm:$0xff]
      %v526 = vld [vmem:[%s513 + $0x60] sm:$0xff]
      %v527 = vld [vmem:[%s513 + $0x68] sm:$0xff]
      %v528 = vld [vmem:[%s513 + $0x70] sm:$0xff]
      %v529 = vld [vmem:[%s513 + $0x78] sm:$0xff]
      %v530 = vld [vmem:[%s513 + $0x80] sm:$0xff]
      %v531 = vld [vmem:[%s513 + $0x88] sm:$0xff]
      %v532 = vld [vmem:[%s513 + $0x90] sm:$0xff]
      %v533 = vld [vmem:[%s513 + $0x98] sm:$0xff]
      %v534 = vld [vmem:[%s513 + $0xa0] sm:$0xff]
      %v535 = vld [vmem:[%s513 + $0xa8] sm:$0xff]
      %v536 = vld [vmem:[%s513 + $0xb0] sm:$0xff]
      %v537 = vld [vmem:[%s513 + $0xb8] sm:$0xff]
      %v538 = vld [vmem:[%s513 + $0xc0] sm:$0xff]
      %v539 = vld [vmem:[%s513 + $0xc8] sm:$0xff]
      %v540 = vld [vmem:[%s513 + $0xd0] sm:$0xff]
      %v541 = vld [vmem:[%s513 + $0xd8] sm:$0xff]
      %v542 = vld [vmem:[%s1 + $0x3] sm:$0x1]
      %v543 = vperm.slane %v542, 0
      %v544 = vmul.f32 %v514, %v543
      %v545 = vmul.f32 %v515, %v543
      %v546 = vmul.f32 %v516, %v543
      %v547 = vmul.f32 %v517, %v543
      %v548 = vmul.f32 %v518, %v543
      %v549 = vmul.f32 %v519, %v543
      %v550 = vmul.f32 %v520, %v543
      %v551 = vmul.f32 %v521, %v543
      %v552 = vmul.f32 %v522, %v543
      %v553 = vmul.f32 %v523, %v543
      %v554 = vmul.f32 %v524, %v543
      %v555 = vmul.f32 %v525, %v543
      %v556 = vmul.f32 %v526, %v543
      %v557 = vmul.f32 %v527, %v543
      %v558 = vmul.f32 %v528, %v543
      %v559 = vmul.f32 %v529, %v543
      %v560 = vmul.f32 %v530, %v543
      %v561 = vmul.f32 %v531, %v543
      %v562 = vmul.f32 %v532, %v543
      %v563 = vmul.f32 %v533, %v543
      %v564 = vmul.f32 %v534, %v543
      %v565 = vmul.f32 %v535, %v543
      %v566 = vmul.f32 %v536, %v543
      %v567 = vmul.f32 %v537, %v543
      %v568 = vmul.f32 %v538, %v543
      %v569 = vmul.f32 %v539, %v543
      %v570 = vmul.f32 %v540, %v543
      %v571 = vmul.f32 %v541, %v543
      %v572 = vadd.f32 %v484, %v544
      %v573 = vadd.f32 %v485, %v545
      %v574 = vadd.f32 %v486, %v546
      %v575 = vadd.f32 %v487, %v547
      %v576 = vadd.f32 %v488, %v548
      %v577 = vadd.f32 %v489, %v549
      %v578 = vadd.f32 %v490, %v550
      %v579 = vadd.f32 %v491, %v551
      %v580 = vadd.f32 %v492, %v552
      %v581 = vadd.f32 %v493, %v553
      %v582 = vadd.f32 %v494, %v554
      %v583 = vadd.f32 %v495, %v555
      %v584 = vadd.f32 %v496, %v556
      %v585 = vadd.f32 %v497, %v557
      %v586 = vadd.f32 %v498, %v558
      %v587 = vadd.f32 %v499, %v559
      %v588 = vadd.f32 %v500, %v560
      %v589 = vadd.f32 %v501, %v561
      %v590 = vadd.f32 %v502, %v562
      %v591 = vadd.f32 %v503, %v563
      %v592 = vadd.f32 %v504, %v564
      %v593 = vadd.f32 %v505, %v565
      %v594 = vadd.f32 %v506, %v566
      %v595 = vadd.f32 %v507, %v567
      %v596 = vadd.f32 %v508, %v568
      %v597 = vadd.f32 %v509, %v569
      %v598 = vadd.f32 %v510, %v570
      %v599 = vadd.f32 %v511, %v571
      %s600 = sadd.s32 %s248, 17
      %s601 = scalar_lea.vmem %s237, %s600
      %v602 = vld [vmem:[%s601] sm:$0xff]
      %v603 = vld [vmem:[%s601 + $0x8] sm:$0xff]
      %v604 = vld [vmem:[%s601 + $0x10] sm:$0xff]
      %v605 = vld [vmem:[%s601 + $0x18] sm:$0xff]
      %v606 = vld [vmem:[%s601 + $0x20] sm:$0xff]
      %v607 = vld [vmem:[%s601 + $0x28] sm:$0xff]
      %v608 = vld [vmem:[%s601 + $0x30] sm:$0xff]
      %v609 = vld [vmem:[%s601 + $0x38] sm:$0xff]
      %v610 = vld [vmem:[%s601 + $0x40] sm:$0xff]
      %v611 = vld [vmem:[%s601 + $0x48] sm:$0xff]
      %v612 = vld [vmem:[%s601 + $0x50] sm:$0xff]
      %v613 = vld [vmem:[%s601 + $0x58] sm:$0xff]
      %v614 = vld [vmem:[%s601 + $0x60] sm:$0xff]
      %v615 = vld [vmem:[%s601 + $0x68] sm:$0xff]
      %v616 = vld [vmem:[%s601 + $0x70] sm:$0xff]
      %v617 = vld [vmem:[%s601 + $0x78] sm:$0xff]
      %v618 = vld [vmem:[%s601 + $0x80] sm:$0xff]
      %v619 = vld [vmem:[%s601 + $0x88] sm:$0xff]
      %v620 = vld [vmem:[%s601 + $0x90] sm:$0xff]
      %v621 = vld [vmem:[%s601 + $0x98] sm:$0xff]
      %v622 = vld [vmem:[%s601 + $0xa0] sm:$0xff]
      %v623 = vld [vmem:[%s601 + $0xa8] sm:$0xff]
      %v624 = vld [vmem:[%s601 + $0xb0] sm:$0xff]
      %v625 = vld [vmem:[%s601 + $0xb8] sm:$0xff]
      %v626 = vld [vmem:[%s601 + $0xc0] sm:$0xff]
      %v627 = vld [vmem:[%s601 + $0xc8] sm:$0xff]
      %v628 = vld [vmem:[%s601 + $0xd0] sm:$0xff]
      %v629 = vld [vmem:[%s601 + $0xd8] sm:$0xff]
      %v630 = vld [vmem:[%s1 + $0x4] sm:$0x1]
      %v631 = vperm.slane %v630, 0
      %v632 = vmul.f32 %v602, %v631
      %v633 = vmul.f32 %v603, %v631
      %v634 = vmul.f32 %v604, %v631
      %v635 = vmul.f32 %v605, %v631
      %v636 = vmul.f32 %v606, %v631
      %v637 = vmul.f32 %v607, %v631
      %v638 = vmul.f32 %v608, %v631
      %v639 = vmul.f32 %v609, %v631
      %v640 = vmul.f32 %v610, %v631
      %v641 = vmul.f32 %v611, %v631
      %v642 = vmul.f32 %v612, %v631
      %v643 = vmul.f32 %v613, %v631
      %v644 = vmul.f32 %v614, %v631
      %v645 = vmul.f32 %v615, %v631
      %v646 = vmul.f32 %v616, %v631
      %v647 = vmul.f32 %v617, %v631
      %v648 = vmul.f32 %v618, %v631
      %v649 = vmul.f32 %v619, %v631
      %v650 = vmul.f32 %v620, %v631
      %v651 = vmul.f32 %v621, %v631
      %v652 = vmul.f32 %v622, %v631
      %v653 = vmul.f32 %v623, %v631
      %v654 = vmul.f32 %v624, %v631
      %v655 = vmul.f32 %v625, %v631
      %v656 = vmul.f32 %v626, %v631
      %v657 = vmul.f32 %v627, %v631
      %v658 = vmul.f32 %v628, %v631
      %v659 = vmul.f32 %v629, %v631
      %v660 = vadd.f32 %v572, %v632
      %v661 = vadd.f32 %v573, %v633
      %v662 = vadd.f32 %v574, %v634
      %v663 = vadd.f32 %v575, %v635
      %v664 = vadd.f32 %v576, %v636
      %v665 = vadd.f32 %v577, %v637
      %v666 = vadd.f32 %v578, %v638
      %v667 = vadd.f32 %v579, %v639
      %v668 = vadd.f32 %v580, %v640
      %v669 = vadd.f32 %v581, %v641
      %v670 = vadd.f32 %v582, %v642
      %v671 = vadd.f32 %v583, %v643
      %v672 = vadd.f32 %v584, %v644
      %v673 = vadd.f32 %v585, %v645
      %v674 = vadd.f32 %v586, %v646
      %v675 = vadd.f32 %v587, %v647
      %v676 = vadd.f32 %v588, %v648
      %v677 = vadd.f32 %v589, %v649
      %v678 = vadd.f32 %v590, %v650
      %v679 = vadd.f32 %v591, %v651
      %v680 = vadd.f32 %v592, %v652
      %v681 = vadd.f32 %v593, %v653
      %v682 = vadd.f32 %v594, %v654
      %v683 = vadd.f32 %v595, %v655
      %v684 = vadd.f32 %v596, %v656
      %v685 = vadd.f32 %v597, %v657
      %v686 = vadd.f32 %v598, %v658
      %v687 = vadd.f32 %v599, %v659
      %s688 = sadd.s32 %s248, 18
      %s689 = scalar_lea.vmem %s237, %s688
      %v690 = vld [vmem:[%s689] sm:$0xff]
      %v691 = vld [vmem:[%s689 + $0x8] sm:$0xff]
      %v692 = vld [vmem:[%s689 + $0x10] sm:$0xff]
      %v693 = vld [vmem:[%s689 + $0x18] sm:$0xff]
      %v694 = vld [vmem:[%s689 + $0x20] sm:$0xff]
      %v695 = vld [vmem:[%s689 + $0x28] sm:$0xff]
      %v696 = vld [vmem:[%s689 + $0x30] sm:$0xff]
      %v697 = vld [vmem:[%s689 + $0x38] sm:$0xff]
      %v698 = vld [vmem:[%s689 + $0x40] sm:$0xff]
      %v699 = vld [vmem:[%s689 + $0x48] sm:$0xff]
      %v700 = vld [vmem:[%s689 + $0x50] sm:$0xff]
      %v701 = vld [vmem:[%s689 + $0x58] sm:$0xff]
      %v702 = vld [vmem:[%s689 + $0x60] sm:$0xff]
      %v703 = vld [vmem:[%s689 + $0x68] sm:$0xff]
      %v704 = vld [vmem:[%s689 + $0x70] sm:$0xff]
      %v705 = vld [vmem:[%s689 + $0x78] sm:$0xff]
      %v706 = vld [vmem:[%s689 + $0x80] sm:$0xff]
      %v707 = vld [vmem:[%s689 + $0x88] sm:$0xff]
      %v708 = vld [vmem:[%s689 + $0x90] sm:$0xff]
      %v709 = vld [vmem:[%s689 + $0x98] sm:$0xff]
      %v710 = vld [vmem:[%s689 + $0xa0] sm:$0xff]
      %v711 = vld [vmem:[%s689 + $0xa8] sm:$0xff]
      %v712 = vld [vmem:[%s689 + $0xb0] sm:$0xff]
      %v713 = vld [vmem:[%s689 + $0xb8] sm:$0xff]
      %v714 = vld [vmem:[%s689 + $0xc0] sm:$0xff]
      %v715 = vld [vmem:[%s689 + $0xc8] sm:$0xff]
      %v716 = vld [vmem:[%s689 + $0xd0] sm:$0xff]
      %v717 = vld [vmem:[%s689 + $0xd8] sm:$0xff]
      %v718 = vld [vmem:[%s1 + $0x5] sm:$0x1]
      %v719 = vperm.slane %v718, 0
      %v720 = vmul.f32 %v690, %v719
      %v721 = vmul.f32 %v691, %v719
      %v722 = vmul.f32 %v692, %v719
      %v723 = vmul.f32 %v693, %v719
      %v724 = vmul.f32 %v694, %v719
      %v725 = vmul.f32 %v695, %v719
      %v726 = vmul.f32 %v696, %v719
      %v727 = vmul.f32 %v697, %v719
      %v728 = vmul.f32 %v698, %v719
      %v729 = vmul.f32 %v699, %v719
      %v730 = vmul.f32 %v700, %v719
      %v731 = vmul.f32 %v701, %v719
      %v732 = vmul.f32 %v702, %v719
      %v733 = vmul.f32 %v703, %v719
      %v734 = vmul.f32 %v704, %v719
      %v735 = vmul.f32 %v705, %v719
      %v736 = vmul.f32 %v706, %v719
      %v737 = vmul.f32 %v707, %v719
      %v738 = vmul.f32 %v708, %v719
      %v739 = vmul.f32 %v709, %v719
      %v740 = vmul.f32 %v710, %v719
      %v741 = vmul.f32 %v711, %v719
      %v742 = vmul.f32 %v712, %v719
      %v743 = vmul.f32 %v713, %v719
      %v744 = vmul.f32 %v714, %v719
      %v745 = vmul.f32 %v715, %v719
      %v746 = vmul.f32 %v716, %v719
      %v747 = vmul.f32 %v717, %v719
      %v748 = vadd.f32 %v660, %v720
      %v749 = vadd.f32 %v661, %v721
      %v750 = vadd.f32 %v662, %v722
      %v751 = vadd.f32 %v663, %v723
      %v752 = vadd.f32 %v664, %v724
      %v753 = vadd.f32 %v665, %v725
      %v754 = vadd.f32 %v666, %v726
      %v755 = vadd.f32 %v667, %v727
      %v756 = vadd.f32 %v668, %v728
      %v757 = vadd.f32 %v669, %v729
      %v758 = vadd.f32 %v670, %v730
      %v759 = vadd.f32 %v671, %v731
      %v760 = vadd.f32 %v672, %v732
      %v761 = vadd.f32 %v673, %v733
      %v762 = vadd.f32 %v674, %v734
      %v763 = vadd.f32 %v675, %v735
      %v764 = vadd.f32 %v676, %v736
      %v765 = vadd.f32 %v677, %v737
      %v766 = vadd.f32 %v678, %v738
      %v767 = vadd.f32 %v679, %v739
      %v768 = vadd.f32 %v680, %v740
      %v769 = vadd.f32 %v681, %v741
      %v770 = vadd.f32 %v682, %v742
      %v771 = vadd.f32 %v683, %v743
      %v772 = vadd.f32 %v684, %v744
      %v773 = vadd.f32 %v685, %v745
      %v774 = vadd.f32 %v686, %v746
      %v775 = vadd.f32 %v687, %v747
      %s776 = sadd.s32 %s248, 32
      %s777 = scalar_lea.vmem %s237, %s776
      %v778 = vld [vmem:[%s777] sm:$0xff]
      %v779 = vld [vmem:[%s777 + $0x8] sm:$0xff]
      %v780 = vld [vmem:[%s777 + $0x10] sm:$0xff]
      %v781 = vld [vmem:[%s777 + $0x18] sm:$0xff]
      %v782 = vld [vmem:[%s777 + $0x20] sm:$0xff]
      %v783 = vld [vmem:[%s777 + $0x28] sm:$0xff]
      %v784 = vld [vmem:[%s777 + $0x30] sm:$0xff]
      %v785 = vld [vmem:[%s777 + $0x38] sm:$0xff]
      %v786 = vld [vmem:[%s777 + $0x40] sm:$0xff]
      %v787 = vld [vmem:[%s777 + $0x48] sm:$0xff]
      %v788 = vld [vmem:[%s777 + $0x50] sm:$0xff]
      %v789 = vld [vmem:[%s777 + $0x58] sm:$0xff]
      %v790 = vld [vmem:[%s777 + $0x60] sm:$0xff]
      %v791 = vld [vmem:[%s777 + $0x68] sm:$0xff]
      %v792 = vld [vmem:[%s777 + $0x70] sm:$0xff]
      %v793 = vld [vmem:[%s777 + $0x78] sm:$0xff]
      %v794 = vld [vmem:[%s777 + $0x80] sm:$0xff]
      %v795 = vld [vmem:[%s777 + $0x88] sm:$0xff]
      %v796 = vld [vmem:[%s777 + $0x90] sm:$0xff]
      %v797 = vld [vmem:[%s777 + $0x98] sm:$0xff]
      %v798 = vld [vmem:[%s777 + $0xa0] sm:$0xff]
      %v799 = vld [vmem:[%s777 + $0xa8] sm:$0xff]
      %v800 = vld [vmem:[%s777 + $0xb0] sm:$0xff]
      %v801 = vld [vmem:[%s777 + $0xb8] sm:$0xff]
      %v802 = vld [vmem:[%s777 + $0xc0] sm:$0xff]
      %v803 = vld [vmem:[%s777 + $0xc8] sm:$0xff]
      %v804 = vld [vmem:[%s777 + $0xd0] sm:$0xff]
      %v805 = vld [vmem:[%s777 + $0xd8] sm:$0xff]
      %v806 = vld [vmem:[%s1 + $0x6] sm:$0x1]
      %v807 = vperm.slane %v806, 0
      %v808 = vmul.f32 %v778, %v807
      %v809 = vmul.f32 %v779, %v807
      %v810 = vmul.f32 %v780, %v807
      %v811 = vmul.f32 %v781, %v807
      %v812 = vmul.f32 %v782, %v807
      %v813 = vmul.f32 %v783, %v807
      %v814 = vmul.f32 %v784, %v807
      %v815 = vmul.f32 %v785, %v807
      %v816 = vmul.f32 %v786, %v807
      %v817 = vmul.f32 %v787, %v807
      %v818 = vmul.f32 %v788, %v807
      %v819 = vmul.f32 %v789, %v807
      %v820 = vmul.f32 %v790, %v807
      %v821 = vmul.f32 %v791, %v807
      %v822 = vmul.f32 %v792, %v807
      %v823 = vmul.f32 %v793, %v807
      %v824 = vmul.f32 %v794, %v807
      %v825 = vmul.f32 %v795, %v807
      %v826 = vmul.f32 %v796, %v807
      %v827 = vmul.f32 %v797, %v807
      %v828 = vmul.f32 %v798, %v807
      %v829 = vmul.f32 %v799, %v807
      %v830 = vmul.f32 %v800, %v807
      %v831 = vmul.f32 %v801, %v807
      %v832 = vmul.f32 %v802, %v807
      %v833 = vmul.f32 %v803, %v807
      %v834 = vmul.f32 %v804, %v807
      %v835 = vmul.f32 %v805, %v807
      %v836 = vadd.f32 %v748, %v808
      %v837 = vadd.f32 %v749, %v809
      %v838 = vadd.f32 %v750, %v810
      %v839 = vadd.f32 %v751, %v811
      %v840 = vadd.f32 %v752, %v812
      %v841 = vadd.f32 %v753, %v813
      %v842 = vadd.f32 %v754, %v814
      %v843 = vadd.f32 %v755, %v815
      %v844 = vadd.f32 %v756, %v816
      %v845 = vadd.f32 %v757, %v817
      %v846 = vadd.f32 %v758, %v818
      %v847 = vadd.f32 %v759, %v819
      %v848 = vadd.f32 %v760, %v820
      %v849 = vadd.f32 %v761, %v821
      %v850 = vadd.f32 %v762, %v822
      %v851 = vadd.f32 %v763, %v823
      %v852 = vadd.f32 %v764, %v824
      %v853 = vadd.f32 %v765, %v825
      %v854 = vadd.f32 %v766, %v826
      %v855 = vadd.f32 %v767, %v827
      %v856 = vadd.f32 %v768, %v828
      %v857 = vadd.f32 %v769, %v829
      %v858 = vadd.f32 %v770, %v830
      %v859 = vadd.f32 %v771, %v831
      %v860 = vadd.f32 %v772, %v832
      %v861 = vadd.f32 %v773, %v833
      %v862 = vadd.f32 %v774, %v834
      %v863 = vadd.f32 %v775, %v835
      %s864 = sadd.s32 %s248, 33
      %s865 = scalar_lea.vmem %s237, %s864
      %v866 = vld [vmem:[%s865] sm:$0xff]
      %v867 = vld [vmem:[%s865 + $0x8] sm:$0xff]
      %v868 = vld [vmem:[%s865 + $0x10] sm:$0xff]
      %v869 = vld [vmem:[%s865 + $0x18] sm:$0xff]
      %v870 = vld [vmem:[%s865 + $0x20] sm:$0xff]
      %v871 = vld [vmem:[%s865 + $0x28] sm:$0xff]
      %v872 = vld [vmem:[%s865 + $0x30] sm:$0xff]
      %v873 = vld [vmem:[%s865 + $0x38] sm:$0xff]
      %v874 = vld [vmem:[%s865 + $0x40] sm:$0xff]
      %v875 = vld [vmem:[%s865 + $0x48] sm:$0xff]
      %v876 = vld [vmem:[%s865 + $0x50] sm:$0xff]
      %v877 = vld [vmem:[%s865 + $0x58] sm:$0xff]
      %v878 = vld [vmem:[%s865 + $0x60] sm:$0xff]
      %v879 = vld [vmem:[%s865 + $0x68] sm:$0xff]
      %v880 = vld [vmem:[%s865 + $0x70] sm:$0xff]
      %v881 = vld [vmem:[%s865 + $0x78] sm:$0xff]
      %v882 = vld [vmem:[%s865 + $0x80] sm:$0xff]
      %v883 = vld [vmem:[%s865 + $0x88] sm:$0xff]
      %v884 = vld [vmem:[%s865 + $0x90] sm:$0xff]
      %v885 = vld [vmem:[%s865 + $0x98] sm:$0xff]
      %v886 = vld [vmem:[%s865 + $0xa0] sm:$0xff]
      %v887 = vld [vmem:[%s865 + $0xa8] sm:$0xff]
      %v888 = vld [vmem:[%s865 + $0xb0] sm:$0xff]
      %v889 = vld [vmem:[%s865 + $0xb8] sm:$0xff]
      %v890 = vld [vmem:[%s865 + $0xc0] sm:$0xff]
      %v891 = vld [vmem:[%s865 + $0xc8] sm:$0xff]
      %v892 = vld [vmem:[%s865 + $0xd0] sm:$0xff]
      %v893 = vld [vmem:[%s865 + $0xd8] sm:$0xff]
      %v894 = vld [vmem:[%s1 + $0x7] sm:$0x1]
      %v895 = vperm.slane %v894, 0
      %v896 = vmul.f32 %v866, %v895
      %v897 = vmul.f32 %v867, %v895
      %v898 = vmul.f32 %v868, %v895
      %v899 = vmul.f32 %v869, %v895
      %v900 = vmul.f32 %v870, %v895
      %v901 = vmul.f32 %v871, %v895
      %v902 = vmul.f32 %v872, %v895
      %v903 = vmul.f32 %v873, %v895
      %v904 = vmul.f32 %v874, %v895
      %v905 = vmul.f32 %v875, %v895
      %v906 = vmul.f32 %v876, %v895
      %v907 = vmul.f32 %v877, %v895
      %v908 = vmul.f32 %v878, %v895
      %v909 = vmul.f32 %v879, %v895
      %v910 = vmul.f32 %v880, %v895
      %v911 = vmul.f32 %v881, %v895
      %v912 = vmul.f32 %v882, %v895
      %v913 = vmul.f32 %v883, %v895
      %v914 = vmul.f32 %v884, %v895
      %v915 = vmul.f32 %v885, %v895
      %v916 = vmul.f32 %v886, %v895
      %v917 = vmul.f32 %v887, %v895
      %v918 = vmul.f32 %v888, %v895
      %v919 = vmul.f32 %v889, %v895
      %v920 = vmul.f32 %v890, %v895
      %v921 = vmul.f32 %v891, %v895
      %v922 = vmul.f32 %v892, %v895
      %v923 = vmul.f32 %v893, %v895
      %v924 = vadd.f32 %v836, %v896
      %v925 = vadd.f32 %v837, %v897
      %v926 = vadd.f32 %v838, %v898
      %v927 = vadd.f32 %v839, %v899
      %v928 = vadd.f32 %v840, %v900
      %v929 = vadd.f32 %v841, %v901
      %v930 = vadd.f32 %v842, %v902
      %v931 = vadd.f32 %v843, %v903
      %v932 = vadd.f32 %v844, %v904
      %v933 = vadd.f32 %v845, %v905
      %v934 = vadd.f32 %v846, %v906
      %v935 = vadd.f32 %v847, %v907
      %v936 = vadd.f32 %v848, %v908
      %v937 = vadd.f32 %v849, %v909
      %v938 = vadd.f32 %v850, %v910
      %v939 = vadd.f32 %v851, %v911
      %v940 = vadd.f32 %v852, %v912
      %v941 = vadd.f32 %v853, %v913
      %v942 = vadd.f32 %v854, %v914
      %v943 = vadd.f32 %v855, %v915
      %v944 = vadd.f32 %v856, %v916
      %v945 = vadd.f32 %v857, %v917
      %v946 = vadd.f32 %v858, %v918
      %v947 = vadd.f32 %v859, %v919
      %v948 = vadd.f32 %v860, %v920
      %v949 = vadd.f32 %v861, %v921
      %v950 = vadd.f32 %v862, %v922
      %v951 = vadd.f32 %v863, %v923
      %s952 = sadd.s32 %s248, 34
      %s953 = scalar_lea.vmem %s237, %s952
      %v954 = vld [vmem:[%s953] sm:$0xff]
      %v955 = vld [vmem:[%s953 + $0x8] sm:$0xff]
      %v956 = vld [vmem:[%s953 + $0x10] sm:$0xff]
      %v957 = vld [vmem:[%s953 + $0x18] sm:$0xff]
      %v958 = vld [vmem:[%s953 + $0x20] sm:$0xff]
      %v959 = vld [vmem:[%s953 + $0x28] sm:$0xff]
      %v960 = vld [vmem:[%s953 + $0x30] sm:$0xff]
      %v961 = vld [vmem:[%s953 + $0x38] sm:$0xff]
      %v962 = vld [vmem:[%s953 + $0x40] sm:$0xff]
      %v963 = vld [vmem:[%s953 + $0x48] sm:$0xff]
      %v964 = vld [vmem:[%s953 + $0x50] sm:$0xff]
      %v965 = vld [vmem:[%s953 + $0x58] sm:$0xff]
      %v966 = vld [vmem:[%s953 + $0x60] sm:$0xff]
      %v967 = vld [vmem:[%s953 + $0x68] sm:$0xff]
      %v968 = vld [vmem:[%s953 + $0x70] sm:$0xff]
      %v969 = vld [vmem:[%s953 + $0x78] sm:$0xff]
      %v970 = vld [vmem:[%s953 + $0x80] sm:$0xff]
      %v971 = vld [vmem:[%s953 + $0x88] sm:$0xff]
      %v972 = vld [vmem:[%s953 + $0x90] sm:$0xff]
      %v973 = vld [vmem:[%s953 + $0x98] sm:$0xff]
      %v974 = vld [vmem:[%s953 + $0xa0] sm:$0xff]
      %v975 = vld [vmem:[%s953 + $0xa8] sm:$0xff]
      %v976 = vld [vmem:[%s953 + $0xb0] sm:$0xff]
      %v977 = vld [vmem:[%s953 + $0xb8] sm:$0xff]
      %v978 = vld [vmem:[%s953 + $0xc0] sm:$0xff]
      %v979 = vld [vmem:[%s953 + $0xc8] sm:$0xff]
      %v980 = vld [vmem:[%s953 + $0xd0] sm:$0xff]
      %v981 = vld [vmem:[%s953 + $0xd8] sm:$0xff]
      %v982 = vld [vmem:[%s1 + $0x8] sm:$0x1]
      %v983 = vperm.slane %v982, 0
      %v984 = vmul.f32 %v954, %v983
      %v985 = vmul.f32 %v955, %v983
      %v986 = vmul.f32 %v956, %v983
      %v987 = vmul.f32 %v957, %v983
      %v988 = vmul.f32 %v958, %v983
      %v989 = vmul.f32 %v959, %v983
      %v990 = vmul.f32 %v960, %v983
      %v991 = vmul.f32 %v961, %v983
      %v992 = vmul.f32 %v962, %v983
      %v993 = vmul.f32 %v963, %v983
      %v994 = vmul.f32 %v964, %v983
      %v995 = vmul.f32 %v965, %v983
      %v996 = vmul.f32 %v966, %v983
      %v997 = vmul.f32 %v967, %v983
      %v998 = vmul.f32 %v968, %v983
      %v999 = vmul.f32 %v969, %v983
      %v1000 = vmul.f32 %v970, %v983
      %v1001 = vmul.f32 %v971, %v983
      %v1002 = vmul.f32 %v972, %v983
      %v1003 = vmul.f32 %v973, %v983
      %v1004 = vmul.f32 %v974, %v983
      %v1005 = vmul.f32 %v975, %v983
      %v1006 = vmul.f32 %v976, %v983
      %v1007 = vmul.f32 %v977, %v983
      %v1008 = vmul.f32 %v978, %v983
      %v1009 = vmul.f32 %v979, %v983
      %v1010 = vmul.f32 %v980, %v983
      %v1011 = vmul.f32 %v981, %v983
      %v1012 = vadd.f32 %v924, %v984
      %v1013 = vadd.f32 %v925, %v985
      %v1014 = vadd.f32 %v926, %v986
      %v1015 = vadd.f32 %v927, %v987
      %v1016 = vadd.f32 %v928, %v988
      %v1017 = vadd.f32 %v929, %v989
      %v1018 = vadd.f32 %v930, %v990
      %v1019 = vadd.f32 %v931, %v991
      %v1020 = vadd.f32 %v932, %v992
      %v1021 = vadd.f32 %v933, %v993
      %v1022 = vadd.f32 %v934, %v994
      %v1023 = vadd.f32 %v935, %v995
      %v1024 = vadd.f32 %v936, %v996
      %v1025 = vadd.f32 %v937, %v997
      %v1026 = vadd.f32 %v938, %v998
      %v1027 = vadd.f32 %v939, %v999
      %v1028 = vadd.f32 %v940, %v1000
      %v1029 = vadd.f32 %v941, %v1001
      %v1030 = vadd.f32 %v942, %v1002
      %v1031 = vadd.f32 %v943, %v1003
      %v1032 = vadd.f32 %v944, %v1004
      %v1033 = vadd.f32 %v945, %v1005
      %v1034 = vadd.f32 %v946, %v1006
      %v1035 = vadd.f32 %v947, %v1007
      %v1036 = vadd.f32 %v948, %v1008
      %v1037 = vadd.f32 %v949, %v1009
      %v1038 = vadd.f32 %v950, %v1010
      %v1039 = vadd.f32 %v951, %v1011
      %v1040 = vld [vmem:[%s2] sm:$0x1]
      %v1042 = vperm.slane %v1040, 0
      %v1044 = vadd.f32 %v1012, %v1042
      %v1045 = vadd.f32 %v1013, %v1042
      %v1046 = vadd.f32 %v1014, %v1042
      %v1047 = vadd.f32 %v1015, %v1042
      %v1048 = vadd.f32 %v1016, %v1042
      %v1049 = vadd.f32 %v1017, %v1042
      %v1050 = vadd.f32 %v1018, %v1042
      %v1051 = vadd.f32 %v1019, %v1042
      %v1052 = vadd.f32 %v1020, %v1042
      %v1053 = vadd.f32 %v1021, %v1042
      %v1054 = vadd.f32 %v1022, %v1042
      %v1055 = vadd.f32 %v1023, %v1042
      %v1056 = vadd.f32 %v1024, %v1042
      %v1057 = vadd.f32 %v1025, %v1042
      %v1058 = vadd.f32 %v1026, %v1042
      %v1059 = vadd.f32 %v1027, %v1042
      %v1060 = vadd.f32 %v1028, %v1042
      %v1061 = vadd.f32 %v1029, %v1042
      %v1062 = vadd.f32 %v1030, %v1042
      %v1063 = vadd.f32 %v1031, %v1042
      %v1064 = vadd.f32 %v1032, %v1042
      %v1065 = vadd.f32 %v1033, %v1042
      %v1066 = vadd.f32 %v1034, %v1042
      %v1067 = vadd.f32 %v1035, %v1042
      %v1068 = vadd.f32 %v1036, %v1042
      %v1069 = vadd.f32 %v1037, %v1042
      %v1070 = vadd.f32 %v1038, %v1042
      %v1071 = vadd.f32 %v1039, %v1042
      %v1072 = vld [vmem:[%s3] sm:$0x1]
      %1074 = vset.pattern.permute.xlu0 0
      %1075 = vperm.xlu0 %1074, %v1044
      %v1076 = vpop.permute.xlu0 %1075
      %1079 = vset.pattern.permute.xlu0 0
      %1080 = vperm.xlu0 %1079, %v1045
      %v1081 = vpop.permute.xlu0 %1080
      %1084 = vset.pattern.permute.xlu0 0
      %1085 = vperm.xlu0 %1084, %v1046
      %v1086 = vpop.permute.xlu0 %1085
      %1089 = vset.pattern.permute.xlu0 0
      %1090 = vperm.xlu0 %1089, %v1047
      %v1091 = vpop.permute.xlu0 %1090
      %1094 = vset.pattern.permute.xlu0 0
      %1095 = vperm.xlu0 %1094, %v1048
      %v1096 = vpop.permute.xlu0 %1095
      %1099 = vset.pattern.permute.xlu0 0
      %1100 = vperm.xlu0 %1099, %v1049
      %v1101 = vpop.permute.xlu0 %1100
      %1104 = vset.pattern.permute.xlu0 0
      %1105 = vperm.xlu0 %1104, %v1050
      %v1106 = vpop.permute.xlu0 %1105
      %1109 = vset.pattern.permute.xlu0 0
      %1110 = vperm.xlu0 %1109, %v1051
      %v1111 = vpop.permute.xlu0 %1110
      %1114 = vset.pattern.permute.xlu0 0
      %1115 = vperm.xlu0 %1114, %v1052
      %v1116 = vpop.permute.xlu0 %1115
      %1119 = vset.pattern.permute.xlu0 0
      %1120 = vperm.xlu0 %1119, %v1053
      %v1121 = vpop.permute.xlu0 %1120
      %1124 = vset.pattern.permute.xlu0 0
      %1125 = vperm.xlu0 %1124, %v1054
      %v1126 = vpop.permute.xlu0 %1125
      %1129 = vset.pattern.permute.xlu0 0
      %1130 = vperm.xlu0 %1129, %v1055
      %v1131 = vpop.permute.xlu0 %1130
      %1134 = vset.pattern.permute.xlu0 0
      %1135 = vperm.xlu0 %1134, %v1056
      %v1136 = vpop.permute.xlu0 %1135
      %1139 = vset.pattern.permute.xlu0 0
      %1140 = vperm.xlu0 %1139, %v1057
      %v1141 = vpop.permute.xlu0 %1140
      %1144 = vset.pattern.permute.xlu0 0
      %1145 = vperm.xlu0 %1144, %v1058
      %v1146 = vpop.permute.xlu0 %1145
      %1149 = vset.pattern.permute.xlu0 0
      %1150 = vperm.xlu0 %1149, %v1059
      %v1151 = vpop.permute.xlu0 %1150
      %1154 = vset.pattern.permute.xlu0 0
      %1155 = vperm.xlu0 %1154, %v1060
      %v1156 = vpop.permute.xlu0 %1155
      %1159 = vset.pattern.permute.xlu0 0
      %1160 = vperm.xlu0 %1159, %v1061
      %v1161 = vpop.permute.xlu0 %1160
      %1164 = vset.pattern.permute.xlu0 0
      %1165 = vperm.xlu0 %1164, %v1062
      %v1166 = vpop.permute.xlu0 %1165
      %1169 = vset.pattern.permute.xlu0 0
      %1170 = vperm.xlu0 %1169, %v1063
      %v1171 = vpop.permute.xlu0 %1170
      %1174 = vset.pattern.permute.xlu0 0
      %1175 = vperm.xlu0 %1174, %v1064
      %v1176 = vpop.permute.xlu0 %1175
      %1179 = vset.pattern.permute.xlu0 0
      %1180 = vperm.xlu0 %1179, %v1065
      %v1181 = vpop.permute.xlu0 %1180
      %1184 = vset.pattern.permute.xlu0 0
      %1185 = vperm.xlu0 %1184, %v1066
      %v1186 = vpop.permute.xlu0 %1185
      %1189 = vset.pattern.permute.xlu0 0
      %1190 = vperm.xlu0 %1189, %v1067
      %v1191 = vpop.permute.xlu0 %1190
      %1194 = vset.pattern.permute.xlu0 0
      %1195 = vperm.xlu0 %1194, %v1068
      %v1196 = vpop.permute.xlu0 %1195
      %1199 = vset.pattern.permute.xlu0 0
      %1200 = vperm.xlu0 %1199, %v1069
      %v1201 = vpop.permute.xlu0 %1200
      %1204 = vset.pattern.permute.xlu0 0
      %1205 = vperm.xlu0 %1204, %v1070
      %v1206 = vpop.permute.xlu0 %1205
      %1209 = vset.pattern.permute.xlu0 0
      %1210 = vperm.xlu0 %1209, %v1071
      %v1211 = vpop.permute.xlu0 %1210
      %v1213 = vperm.slane %v1072, 0
      %v1214 = vmul.f32 %v1076, %v1213
      %v1215 = vmul.f32 %v1081, %v1213
      %v1216 = vmul.f32 %v1086, %v1213
      %v1217 = vmul.f32 %v1091, %v1213
      %v1218 = vmul.f32 %v1096, %v1213
      %v1219 = vmul.f32 %v1101, %v1213
      %v1220 = vmul.f32 %v1106, %v1213
      %v1221 = vmul.f32 %v1111, %v1213
      %v1222 = vmul.f32 %v1116, %v1213
      %v1223 = vmul.f32 %v1121, %v1213
      %v1224 = vmul.f32 %v1126, %v1213
      %v1225 = vmul.f32 %v1131, %v1213
      %v1226 = vmul.f32 %v1136, %v1213
      %v1227 = vmul.f32 %v1141, %v1213
      %v1228 = vmul.f32 %v1146, %v1213
      %v1229 = vmul.f32 %v1151, %v1213
      %v1230 = vmul.f32 %v1156, %v1213
      %v1231 = vmul.f32 %v1161, %v1213
      %v1232 = vmul.f32 %v1166, %v1213
      %v1233 = vmul.f32 %v1171, %v1213
      %v1234 = vmul.f32 %v1176, %v1213
      %v1235 = vmul.f32 %v1181, %v1213
      %v1236 = vmul.f32 %v1186, %v1213
      %v1237 = vmul.f32 %v1191, %v1213
      %v1238 = vmul.f32 %v1196, %v1213
      %v1239 = vmul.f32 %v1201, %v1213
      %v1240 = vmul.f32 %v1206, %v1213
      %v1241 = vmul.f32 %v1211, %v1213
      %v1242 = vadd.f32 %v1214, 0.0
      %v1243 = vadd.f32 %v1215, 0.0
      %v1244 = vadd.f32 %v1216, 0.0
      %v1245 = vadd.f32 %v1217, 0.0
      %v1246 = vadd.f32 %v1218, 0.0
      %v1247 = vadd.f32 %v1219, 0.0
      %v1248 = vadd.f32 %v1220, 0.0
      %v1249 = vadd.f32 %v1221, 0.0
      %v1250 = vadd.f32 %v1222, 0.0
      %v1251 = vadd.f32 %v1223, 0.0
      %v1252 = vadd.f32 %v1224, 0.0
      %v1253 = vadd.f32 %v1225, 0.0
      %v1254 = vadd.f32 %v1226, 0.0
      %v1255 = vadd.f32 %v1227, 0.0
      %v1256 = vadd.f32 %v1228, 0.0
      %v1257 = vadd.f32 %v1229, 0.0
      %v1258 = vadd.f32 %v1230, 0.0
      %v1259 = vadd.f32 %v1231, 0.0
      %v1260 = vadd.f32 %v1232, 0.0
      %v1261 = vadd.f32 %v1233, 0.0
      %v1262 = vadd.f32 %v1234, 0.0
      %v1263 = vadd.f32 %v1235, 0.0
      %v1264 = vadd.f32 %v1236, 0.0
      %v1265 = vadd.f32 %v1237, 0.0
      %v1266 = vadd.f32 %v1238, 0.0
      %v1267 = vadd.f32 %v1239, 0.0
      %v1268 = vadd.f32 %v1240, 0.0
      %v1269 = vadd.f32 %v1241, 0.0
      %v1270 = vld [vmem:[%s3 + $0x1] sm:$0x1]
      %1271 = vset.pattern.permute.xlu0 1
      %1272 = vperm.xlu0 %1271, %v1044
      %v1273 = vpop.permute.xlu0 %1272
      %1275 = vset.pattern.permute.xlu0 1
      %1276 = vperm.xlu0 %1275, %v1045
      %v1277 = vpop.permute.xlu0 %1276
      %1279 = vset.pattern.permute.xlu0 1
      %1280 = vperm.xlu0 %1279, %v1046
      %v1281 = vpop.permute.xlu0 %1280
      %1283 = vset.pattern.permute.xlu0 1
      %1284 = vperm.xlu0 %1283, %v1047
      %v1285 = vpop.permute.xlu0 %1284
      %1287 = vset.pattern.permute.xlu0 1
      %1288 = vperm.xlu0 %1287, %v1048
      %v1289 = vpop.permute.xlu0 %1288
      %1291 = vset.pattern.permute.xlu0 1
      %1292 = vperm.xlu0 %1291, %v1049
      %v1293 = vpop.permute.xlu0 %1292
      %1295 = vset.pattern.permute.xlu0 1
      %1296 = vperm.xlu0 %1295, %v1050
      %v1297 = vpop.permute.xlu0 %1296
      %1299 = vset.pattern.permute.xlu0 1
      %1300 = vperm.xlu0 %1299, %v1051
      %v1301 = vpop.permute.xlu0 %1300
      %1303 = vset.pattern.permute.xlu0 1
      %1304 = vperm.xlu0 %1303, %v1052
      %v1305 = vpop.permute.xlu0 %1304
      %1307 = vset.pattern.permute.xlu0 1
      %1308 = vperm.xlu0 %1307, %v1053
      %v1309 = vpop.permute.xlu0 %1308
      %1311 = vset.pattern.permute.xlu0 1
      %1312 = vperm.xlu0 %1311, %v1054
      %v1313 = vpop.permute.xlu0 %1312
      %1315 = vset.pattern.permute.xlu0 1
      %1316 = vperm.xlu0 %1315, %v1055
      %v1317 = vpop.permute.xlu0 %1316
      %1319 = vset.pattern.permute.xlu0 1
      %1320 = vperm.xlu0 %1319, %v1056
      %v1321 = vpop.permute.xlu0 %1320
      %1323 = vset.pattern.permute.xlu0 1
      %1324 = vperm.xlu0 %1323, %v1057
      %v1325 = vpop.permute.xlu0 %1324
      %1327 = vset.pattern.permute.xlu0 1
      %1328 = vperm.xlu0 %1327, %v1058
      %v1329 = vpop.permute.xlu0 %1328
      %1331 = vset.pattern.permute.xlu0 1
      %1332 = vperm.xlu0 %1331, %v1059
      %v1333 = vpop.permute.xlu0 %1332
      %1335 = vset.pattern.permute.xlu0 1
      %1336 = vperm.xlu0 %1335, %v1060
      %v1337 = vpop.permute.xlu0 %1336
      %1339 = vset.pattern.permute.xlu0 1
      %1340 = vperm.xlu0 %1339, %v1061
      %v1341 = vpop.permute.xlu0 %1340
      %1343 = vset.pattern.permute.xlu0 1
      %1344 = vperm.xlu0 %1343, %v1062
      %v1345 = vpop.permute.xlu0 %1344
      %1347 = vset.pattern.permute.xlu0 1
      %1348 = vperm.xlu0 %1347, %v1063
      %v1349 = vpop.permute.xlu0 %1348
      %1351 = vset.pattern.permute.xlu0 1
      %1352 = vperm.xlu0 %1351, %v1064
      %v1353 = vpop.permute.xlu0 %1352
      %1355 = vset.pattern.permute.xlu0 1
      %1356 = vperm.xlu0 %1355, %v1065
      %v1357 = vpop.permute.xlu0 %1356
      %1359 = vset.pattern.permute.xlu0 1
      %1360 = vperm.xlu0 %1359, %v1066
      %v1361 = vpop.permute.xlu0 %1360
      %1363 = vset.pattern.permute.xlu0 1
      %1364 = vperm.xlu0 %1363, %v1067
      %v1365 = vpop.permute.xlu0 %1364
      %1367 = vset.pattern.permute.xlu0 1
      %1368 = vperm.xlu0 %1367, %v1068
      %v1369 = vpop.permute.xlu0 %1368
      %1371 = vset.pattern.permute.xlu0 1
      %1372 = vperm.xlu0 %1371, %v1069
      %v1373 = vpop.permute.xlu0 %1372
      %1375 = vset.pattern.permute.xlu0 1
      %1376 = vperm.xlu0 %1375, %v1070
      %v1377 = vpop.permute.xlu0 %1376
      %1379 = vset.pattern.permute.xlu0 1
      %1380 = vperm.xlu0 %1379, %v1071
      %v1381 = vpop.permute.xlu0 %1380
      %v1383 = vperm.slane %v1270, 0
      %v1384 = vmul.f32 %v1273, %v1383
      %v1385 = vmul.f32 %v1277, %v1383
      %v1386 = vmul.f32 %v1281, %v1383
      %v1387 = vmul.f32 %v1285, %v1383
      %v1388 = vmul.f32 %v1289, %v1383
      %v1389 = vmul.f32 %v1293, %v1383
      %v1390 = vmul.f32 %v1297, %v1383
      %v1391 = vmul.f32 %v1301, %v1383
      %v1392 = vmul.f32 %v1305, %v1383
      %v1393 = vmul.f32 %v1309, %v1383
      %v1394 = vmul.f32 %v1313, %v1383
      %v1395 = vmul.f32 %v1317, %v1383
      %v1396 = vmul.f32 %v1321, %v1383
      %v1397 = vmul.f32 %v1325, %v1383
      %v1398 = vmul.f32 %v1329, %v1383
      %v1399 = vmul.f32 %v1333, %v1383
      %v1400 = vmul.f32 %v1337, %v1383
      %v1401 = vmul.f32 %v1341, %v1383
      %v1402 = vmul.f32 %v1345, %v1383
      %v1403 = vmul.f32 %v1349, %v1383
      %v1404 = vmul.f32 %v1353, %v1383
      %v1405 = vmul.f32 %v1357, %v1383
      %v1406 = vmul.f32 %v1361, %v1383
      %v1407 = vmul.f32 %v1365, %v1383
      %v1408 = vmul.f32 %v1369, %v1383
      %v1409 = vmul.f32 %v1373, %v1383
      %v1410 = vmul.f32 %v1377, %v1383
      %v1411 = vmul.f32 %v1381, %v1383
      %v1412 = vadd.f32 %v1242, %v1384
      %v1413 = vadd.f32 %v1243, %v1385
      %v1414 = vadd.f32 %v1244, %v1386
      %v1415 = vadd.f32 %v1245, %v1387
      %v1416 = vadd.f32 %v1246, %v1388
      %v1417 = vadd.f32 %v1247, %v1389
      %v1418 = vadd.f32 %v1248, %v1390
      %v1419 = vadd.f32 %v1249, %v1391
      %v1420 = vadd.f32 %v1250, %v1392
      %v1421 = vadd.f32 %v1251, %v1393
      %v1422 = vadd.f32 %v1252, %v1394
      %v1423 = vadd.f32 %v1253, %v1395
      %v1424 = vadd.f32 %v1254, %v1396
      %v1425 = vadd.f32 %v1255, %v1397
      %v1426 = vadd.f32 %v1256, %v1398
      %v1427 = vadd.f32 %v1257, %v1399
      %v1428 = vadd.f32 %v1258, %v1400
      %v1429 = vadd.f32 %v1259, %v1401
      %v1430 = vadd.f32 %v1260, %v1402
      %v1431 = vadd.f32 %v1261, %v1403
      %v1432 = vadd.f32 %v1262, %v1404
      %v1433 = vadd.f32 %v1263, %v1405
      %v1434 = vadd.f32 %v1264, %v1406
      %v1435 = vadd.f32 %v1265, %v1407
      %v1436 = vadd.f32 %v1266, %v1408
      %v1437 = vadd.f32 %v1267, %v1409
      %v1438 = vadd.f32 %v1268, %v1410
      %v1439 = vadd.f32 %v1269, %v1411
      %v1440 = vld [vmem:[%s3 + $0x2] sm:$0x1]
      %1441 = vset.pattern.permute.xlu0 2
      %1442 = vperm.xlu0 %1441, %v1044
      %v1443 = vpop.permute.xlu0 %1442
      %1445 = vset.pattern.permute.xlu0 2
      %1446 = vperm.xlu0 %1445, %v1045
      %v1447 = vpop.permute.xlu0 %1446
      %1449 = vset.pattern.permute.xlu0 2
      %1450 = vperm.xlu0 %1449, %v1046
      %v1451 = vpop.permute.xlu0 %1450
      %1453 = vset.pattern.permute.xlu0 2
      %1454 = vperm.xlu0 %1453, %v1047
      %v1455 = vpop.permute.xlu0 %1454
      %1457 = vset.pattern.permute.xlu0 2
      %1458 = vperm.xlu0 %1457, %v1048
      %v1459 = vpop.permute.xlu0 %1458
      %1461 = vset.pattern.permute.xlu0 2
      %1462 = vperm.xlu0 %1461, %v1049
      %v1463 = vpop.permute.xlu0 %1462
      %1465 = vset.pattern.permute.xlu0 2
      %1466 = vperm.xlu0 %1465, %v1050
      %v1467 = vpop.permute.xlu0 %1466
      %1469 = vset.pattern.permute.xlu0 2
      %1470 = vperm.xlu0 %1469, %v1051
      %v1471 = vpop.permute.xlu0 %1470
      %1473 = vset.pattern.permute.xlu0 2
      %1474 = vperm.xlu0 %1473, %v1052
      %v1475 = vpop.permute.xlu0 %1474
      %1477 = vset.pattern.permute.xlu0 2
      %1478 = vperm.xlu0 %1477, %v1053
      %v1479 = vpop.permute.xlu0 %1478
      %1481 = vset.pattern.permute.xlu0 2
      %1482 = vperm.xlu0 %1481, %v1054
      %v1483 = vpop.permute.xlu0 %1482
      %1485 = vset.pattern.permute.xlu0 2
      %1486 = vperm.xlu0 %1485, %v1055
      %v1487 = vpop.permute.xlu0 %1486
      %1489 = vset.pattern.permute.xlu0 2
      %1490 = vperm.xlu0 %1489, %v1056
      %v1491 = vpop.permute.xlu0 %1490
      %1493 = vset.pattern.permute.xlu0 2
      %1494 = vperm.xlu0 %1493, %v1057
      %v1495 = vpop.permute.xlu0 %1494
      %1497 = vset.pattern.permute.xlu0 2
      %1498 = vperm.xlu0 %1497, %v1058
      %v1499 = vpop.permute.xlu0 %1498
      %1501 = vset.pattern.permute.xlu0 2
      %1502 = vperm.xlu0 %1501, %v1059
      %v1503 = vpop.permute.xlu0 %1502
      %1505 = vset.pattern.permute.xlu0 2
      %1506 = vperm.xlu0 %1505, %v1060
      %v1507 = vpop.permute.xlu0 %1506
      %1509 = vset.pattern.permute.xlu0 2
      %1510 = vperm.xlu0 %1509, %v1061
      %v1511 = vpop.permute.xlu0 %1510
      %1513 = vset.pattern.permute.xlu0 2
      %1514 = vperm.xlu0 %1513, %v1062
      %v1515 = vpop.permute.xlu0 %1514
      %1517 = vset.pattern.permute.xlu0 2
      %1518 = vperm.xlu0 %1517, %v1063
      %v1519 = vpop.permute.xlu0 %1518
      %1521 = vset.pattern.permute.xlu0 2
      %1522 = vperm.xlu0 %1521, %v1064
      %v1523 = vpop.permute.xlu0 %1522
      %1525 = vset.pattern.permute.xlu0 2
      %1526 = vperm.xlu0 %1525, %v1065
      %v1527 = vpop.permute.xlu0 %1526
      %1529 = vset.pattern.permute.xlu0 2
      %1530 = vperm.xlu0 %1529, %v1066
      %v1531 = vpop.permute.xlu0 %1530
      %1533 = vset.pattern.permute.xlu0 2
      %1534 = vperm.xlu0 %1533, %v1067
      %v1535 = vpop.permute.xlu0 %1534
      %1537 = vset.pattern.permute.xlu0 2
      %1538 = vperm.xlu0 %1537, %v1068
      %v1539 = vpop.permute.xlu0 %1538
      %1541 = vset.pattern.permute.xlu0 2
      %1542 = vperm.xlu0 %1541, %v1069
      %v1543 = vpop.permute.xlu0 %1542
      %1545 = vset.pattern.permute.xlu0 2
      %1546 = vperm.xlu0 %1545, %v1070
      %v1547 = vpop.permute.xlu0 %1546
      %1549 = vset.pattern.permute.xlu0 2
      %1550 = vperm.xlu0 %1549, %v1071
      %v1551 = vpop.permute.xlu0 %1550
      %v1553 = vperm.slane %v1440, 0
      %v1554 = vmul.f32 %v1443, %v1553
      %v1555 = vmul.f32 %v1447, %v1553
      %v1556 = vmul.f32 %v1451, %v1553
      %v1557 = vmul.f32 %v1455, %v1553
      %v1558 = vmul.f32 %v1459, %v1553
      %v1559 = vmul.f32 %v1463, %v1553
      %v1560 = vmul.f32 %v1467, %v1553
      %v1561 = vmul.f32 %v1471, %v1553
      %v1562 = vmul.f32 %v1475, %v1553
      %v1563 = vmul.f32 %v1479, %v1553
      %v1564 = vmul.f32 %v1483, %v1553
      %v1565 = vmul.f32 %v1487, %v1553
      %v1566 = vmul.f32 %v1491, %v1553
      %v1567 = vmul.f32 %v1495, %v1553
      %v1568 = vmul.f32 %v1499, %v1553
      %v1569 = vmul.f32 %v1503, %v1553
      %v1570 = vmul.f32 %v1507, %v1553
      %v1571 = vmul.f32 %v1511, %v1553
      %v1572 = vmul.f32 %v1515, %v1553
      %v1573 = vmul.f32 %v1519, %v1553
      %v1574 = vmul.f32 %v1523, %v1553
      %v1575 = vmul.f32 %v1527, %v1553
      %v1576 = vmul.f32 %v1531, %v1553
      %v1577 = vmul.f32 %v1535, %v1553
      %v1578 = vmul.f32 %v1539, %v1553
      %v1579 = vmul.f32 %v1543, %v1553
      %v1580 = vmul.f32 %v1547, %v1553
      %v1581 = vmul.f32 %v1551, %v1553
      %v1582 = vadd.f32 %v1412, %v1554
      %v1583 = vadd.f32 %v1413, %v1555
      %v1584 = vadd.f32 %v1414, %v1556
      %v1585 = vadd.f32 %v1415, %v1557
      %v1586 = vadd.f32 %v1416, %v1558
      %v1587 = vadd.f32 %v1417, %v1559
      %v1588 = vadd.f32 %v1418, %v1560
      %v1589 = vadd.f32 %v1419, %v1561
      %v1590 = vadd.f32 %v1420, %v1562
      %v1591 = vadd.f32 %v1421, %v1563
      %v1592 = vadd.f32 %v1422, %v1564
      %v1593 = vadd.f32 %v1423, %v1565
      %v1594 = vadd.f32 %v1424, %v1566
      %v1595 = vadd.f32 %v1425, %v1567
      %v1596 = vadd.f32 %v1426, %v1568
      %v1597 = vadd.f32 %v1427, %v1569
      %v1598 = vadd.f32 %v1428, %v1570
      %v1599 = vadd.f32 %v1429, %v1571
      %v1600 = vadd.f32 %v1430, %v1572
      %v1601 = vadd.f32 %v1431, %v1573
      %v1602 = vadd.f32 %v1432, %v1574
      %v1603 = vadd.f32 %v1433, %v1575
      %v1604 = vadd.f32 %v1434, %v1576
      %v1605 = vadd.f32 %v1435, %v1577
      %v1606 = vadd.f32 %v1436, %v1578
      %v1607 = vadd.f32 %v1437, %v1579
      %v1608 = vadd.f32 %v1438, %v1580
      %v1609 = vadd.f32 %v1439, %v1581
      %v1610 = vld [vmem:[%s3 + $0x3] sm:$0x1]
      %1611 = vset.pattern.permute.xlu0 3
      %1612 = vperm.xlu0 %1611, %v1044
      %v1613 = vpop.permute.xlu0 %1612
      %1615 = vset.pattern.permute.xlu0 3
      %1616 = vperm.xlu0 %1615, %v1045
      %v1617 = vpop.permute.xlu0 %1616
      %1619 = vset.pattern.permute.xlu0 3
      %1620 = vperm.xlu0 %1619, %v1046
      %v1621 = vpop.permute.xlu0 %1620
      %1623 = vset.pattern.permute.xlu0 3
      %1624 = vperm.xlu0 %1623, %v1047
      %v1625 = vpop.permute.xlu0 %1624
      %1627 = vset.pattern.permute.xlu0 3
      %1628 = vperm.xlu0 %1627, %v1048
      %v1629 = vpop.permute.xlu0 %1628
      %1631 = vset.pattern.permute.xlu0 3
      %1632 = vperm.xlu0 %1631, %v1049
      %v1633 = vpop.permute.xlu0 %1632
      %1635 = vset.pattern.permute.xlu0 3
      %1636 = vperm.xlu0 %1635, %v1050
      %v1637 = vpop.permute.xlu0 %1636
      %1639 = vset.pattern.permute.xlu0 3
      %1640 = vperm.xlu0 %1639, %v1051
      %v1641 = vpop.permute.xlu0 %1640
      %1643 = vset.pattern.permute.xlu0 3
      %1644 = vperm.xlu0 %1643, %v1052
      %v1645 = vpop.permute.xlu0 %1644
      %1647 = vset.pattern.permute.xlu0 3
      %1648 = vperm.xlu0 %1647, %v1053
      %v1649 = vpop.permute.xlu0 %1648
      %1651 = vset.pattern.permute.xlu0 3
      %1652 = vperm.xlu0 %1651, %v1054
      %v1653 = vpop.permute.xlu0 %1652
      %1655 = vset.pattern.permute.xlu0 3
      %1656 = vperm.xlu0 %1655, %v1055
      %v1657 = vpop.permute.xlu0 %1656
      %1659 = vset.pattern.permute.xlu0 3
      %1660 = vperm.xlu0 %1659, %v1056
      %v1661 = vpop.permute.xlu0 %1660
      %1663 = vset.pattern.permute.xlu0 3
      %1664 = vperm.xlu0 %1663, %v1057
      %v1665 = vpop.permute.xlu0 %1664
      %1667 = vset.pattern.permute.xlu0 3
      %1668 = vperm.xlu0 %1667, %v1058
      %v1669 = vpop.permute.xlu0 %1668
      %1671 = vset.pattern.permute.xlu0 3
      %1672 = vperm.xlu0 %1671, %v1059
      %v1673 = vpop.permute.xlu0 %1672
      %1675 = vset.pattern.permute.xlu0 3
      %1676 = vperm.xlu0 %1675, %v1060
      %v1677 = vpop.permute.xlu0 %1676
      %1679 = vset.pattern.permute.xlu0 3
      %1680 = vperm.xlu0 %1679, %v1061
      %v1681 = vpop.permute.xlu0 %1680
      %1683 = vset.pattern.permute.xlu0 3
      %1684 = vperm.xlu0 %1683, %v1062
      %v1685 = vpop.permute.xlu0 %1684
      %1687 = vset.pattern.permute.xlu0 3
      %1688 = vperm.xlu0 %1687, %v1063
      %v1689 = vpop.permute.xlu0 %1688
      %1691 = vset.pattern.permute.xlu0 3
      %1692 = vperm.xlu0 %1691, %v1064
      %v1693 = vpop.permute.xlu0 %1692
      %1695 = vset.pattern.permute.xlu0 3
      %1696 = vperm.xlu0 %1695, %v1065
      %v1697 = vpop.permute.xlu0 %1696
      %1699 = vset.pattern.permute.xlu0 3
      %1700 = vperm.xlu0 %1699, %v1066
      %v1701 = vpop.permute.xlu0 %1700
      %1703 = vset.pattern.permute.xlu0 3
      %1704 = vperm.xlu0 %1703, %v1067
      %v1705 = vpop.permute.xlu0 %1704
      %1707 = vset.pattern.permute.xlu0 3
      %1708 = vperm.xlu0 %1707, %v1068
      %v1709 = vpop.permute.xlu0 %1708
      %1711 = vset.pattern.permute.xlu0 3
      %1712 = vperm.xlu0 %1711, %v1069
      %v1713 = vpop.permute.xlu0 %1712
      %1715 = vset.pattern.permute.xlu0 3
      %1716 = vperm.xlu0 %1715, %v1070
      %v1717 = vpop.permute.xlu0 %1716
      %1719 = vset.pattern.permute.xlu0 3
      %1720 = vperm.xlu0 %1719, %v1071
      %v1721 = vpop.permute.xlu0 %1720
      %v1723 = vperm.slane %v1610, 0
      %v1724 = vmul.f32 %v1613, %v1723
      %v1725 = vmul.f32 %v1617, %v1723
      %v1726 = vmul.f32 %v1621, %v1723
      %v1727 = vmul.f32 %v1625, %v1723
      %v1728 = vmul.f32 %v1629, %v1723
      %v1729 = vmul.f32 %v1633, %v1723
      %v1730 = vmul.f32 %v1637, %v1723
      %v1731 = vmul.f32 %v1641, %v1723
      %v1732 = vmul.f32 %v1645, %v1723
      %v1733 = vmul.f32 %v1649, %v1723
      %v1734 = vmul.f32 %v1653, %v1723
      %v1735 = vmul.f32 %v1657, %v1723
      %v1736 = vmul.f32 %v1661, %v1723
      %v1737 = vmul.f32 %v1665, %v1723
      %v1738 = vmul.f32 %v1669, %v1723
      %v1739 = vmul.f32 %v1673, %v1723
      %v1740 = vmul.f32 %v1677, %v1723
      %v1741 = vmul.f32 %v1681, %v1723
      %v1742 = vmul.f32 %v1685, %v1723
      %v1743 = vmul.f32 %v1689, %v1723
      %v1744 = vmul.f32 %v1693, %v1723
      %v1745 = vmul.f32 %v1697, %v1723
      %v1746 = vmul.f32 %v1701, %v1723
      %v1747 = vmul.f32 %v1705, %v1723
      %v1748 = vmul.f32 %v1709, %v1723
      %v1749 = vmul.f32 %v1713, %v1723
      %v1750 = vmul.f32 %v1717, %v1723
      %v1751 = vmul.f32 %v1721, %v1723
      %v1752 = vadd.f32 %v1582, %v1724
      %v1753 = vadd.f32 %v1583, %v1725
      %v1754 = vadd.f32 %v1584, %v1726
      %v1755 = vadd.f32 %v1585, %v1727
      %v1756 = vadd.f32 %v1586, %v1728
      %v1757 = vadd.f32 %v1587, %v1729
      %v1758 = vadd.f32 %v1588, %v1730
      %v1759 = vadd.f32 %v1589, %v1731
      %v1760 = vadd.f32 %v1590, %v1732
      %v1761 = vadd.f32 %v1591, %v1733
      %v1762 = vadd.f32 %v1592, %v1734
      %v1763 = vadd.f32 %v1593, %v1735
      %v1764 = vadd.f32 %v1594, %v1736
      %v1765 = vadd.f32 %v1595, %v1737
      %v1766 = vadd.f32 %v1596, %v1738
      %v1767 = vadd.f32 %v1597, %v1739
      %v1768 = vadd.f32 %v1598, %v1740
      %v1769 = vadd.f32 %v1599, %v1741
      %v1770 = vadd.f32 %v1600, %v1742
      %v1771 = vadd.f32 %v1601, %v1743
      %v1772 = vadd.f32 %v1602, %v1744
      %v1773 = vadd.f32 %v1603, %v1745
      %v1774 = vadd.f32 %v1604, %v1746
      %v1775 = vadd.f32 %v1605, %v1747
      %v1776 = vadd.f32 %v1606, %v1748
      %v1777 = vadd.f32 %v1607, %v1749
      %v1778 = vadd.f32 %v1608, %v1750
      %v1779 = vadd.f32 %v1609, %v1751
      %v1780 = vld [vmem:[%s4] sm:$0x1]
      %v1782 = vperm.slane %v1780, 0
      %v1784 = vadd.f32 %v1752, %v1782
      %v1785 = vadd.f32 %v1753, %v1782
      %v1786 = vadd.f32 %v1754, %v1782
      %v1787 = vadd.f32 %v1755, %v1782
      %v1788 = vadd.f32 %v1756, %v1782
      %v1789 = vadd.f32 %v1757, %v1782
      %v1790 = vadd.f32 %v1758, %v1782
      %v1791 = vadd.f32 %v1759, %v1782
      %v1792 = vadd.f32 %v1760, %v1782
      %v1793 = vadd.f32 %v1761, %v1782
      %v1794 = vadd.f32 %v1762, %v1782
      %v1795 = vadd.f32 %v1763, %v1782
      %v1796 = vadd.f32 %v1764, %v1782
      %v1797 = vadd.f32 %v1765, %v1782
      %v1798 = vadd.f32 %v1766, %v1782
      %v1799 = vadd.f32 %v1767, %v1782
      %v1800 = vadd.f32 %v1768, %v1782
      %v1801 = vadd.f32 %v1769, %v1782
      %v1802 = vadd.f32 %v1770, %v1782
      %v1803 = vadd.f32 %v1771, %v1782
      %v1804 = vadd.f32 %v1772, %v1782
      %v1805 = vadd.f32 %v1773, %v1782
      %v1806 = vadd.f32 %v1774, %v1782
      %v1807 = vadd.f32 %v1775, %v1782
      %v1808 = vadd.f32 %v1776, %v1782
      %v1809 = vadd.f32 %v1777, %v1782
      %v1810 = vadd.f32 %v1778, %v1782
      %v1811 = vadd.f32 %v1779, %v1782
      %vm1812 = vcmask 64512
      %1813 = vst.msk [vmem:[%s246] sm:$0xff] %vm1812, %v1784
      %1814 = vst.msk [vmem:[%s246 + $0x8] sm:$0xff] %vm1812, %v1785
      %1815 = vst.msk [vmem:[%s246 + $0x10] sm:$0xff] %vm1812, %v1786
      %1816 = vst.msk [vmem:[%s246 + $0x18] sm:$0xff] %vm1812, %v1787
      %1817 = vst.msk [vmem:[%s246 + $0x20] sm:$0xff] %vm1812, %v1788
      %1818 = vst.msk [vmem:[%s246 + $0x28] sm:$0xff] %vm1812, %v1789
      %1819 = vst.msk [vmem:[%s246 + $0x30] sm:$0xff] %vm1812, %v1790
      %1820 = vst.msk [vmem:[%s246 + $0x38] sm:$0xff] %vm1812, %v1791
      %1821 = vst.msk [vmem:[%s246 + $0x40] sm:$0xff] %vm1812, %v1792
      %1822 = vst.msk [vmem:[%s246 + $0x48] sm:$0xff] %vm1812, %v1793
      %1823 = vst.msk [vmem:[%s246 + $0x50] sm:$0xff] %vm1812, %v1794
      %1824 = vst.msk [vmem:[%s246 + $0x58] sm:$0xff] %vm1812, %v1795
      %1825 = vst.msk [vmem:[%s246 + $0x60] sm:$0xff] %vm1812, %v1796
      %1826 = vst.msk [vmem:[%s246 + $0x68] sm:$0xff] %vm1812, %v1797
      %1827 = vst.msk [vmem:[%s246 + $0x70] sm:$0xff] %vm1812, %v1798
      %1828 = vst.msk [vmem:[%s246 + $0x78] sm:$0xff] %vm1812, %v1799
      %1829 = vst.msk [vmem:[%s246 + $0x80] sm:$0xff] %vm1812, %v1800
      %1830 = vst.msk [vmem:[%s246 + $0x88] sm:$0xff] %vm1812, %v1801
      %1831 = vst.msk [vmem:[%s246 + $0x90] sm:$0xff] %vm1812, %v1802
      %1832 = vst.msk [vmem:[%s246 + $0x98] sm:$0xff] %vm1812, %v1803
      %1833 = vst.msk [vmem:[%s246 + $0xa0] sm:$0xff] %vm1812, %v1804
      %1834 = vst.msk [vmem:[%s246 + $0xa8] sm:$0xff] %vm1812, %v1805
      %1835 = vst.msk [vmem:[%s246 + $0xb0] sm:$0xff] %vm1812, %v1806
      %1836 = vst.msk [vmem:[%s246 + $0xb8] sm:$0xff] %vm1812, %v1807
      %1837 = vst.msk [vmem:[%s246 + $0xc0] sm:$0xff] %vm1812, %v1808
      %1838 = vst.msk [vmem:[%s246 + $0xc8] sm:$0xff] %vm1812, %v1809
      %1839 = vst.msk [vmem:[%s246 + $0xd0] sm:$0xff] %vm1812, %v1810
      %1840 = vst.msk [vmem:[%s246 + $0xd8] sm:$0xff] %vm1812, %v1811
      %s1841 = smul.u32 28, %s21
      %p1842 = scmp.lt.s32.totalorder %s20, 1
      %s1843 = scalar_select %p1842, %s20, 1
      %p1844 = scmp.lt.s32.totalorder %s1841, 27
      %s1845 = scalar_select %p1844, %s1841, 27
      %s1846 = smul.addr %s1843, 28
      %s1847 = sadd.s32 %s1845, %s1846
      %s1848 = smul.addr %s1847, 8
      %s1849 = scalar_lea.vmem %s5, %s1848
      // Predicated region
      $region41: #{tpu_custom_call.1} parent=39 // pred_check
        %p1850 = pneg %p158
      $region42: #{tpu_custom_call.1} parent=39 // pred_check_branch
        %1852 = sbr.rel (%p1850) target = $region44
      $region43: #{tpu_custom_call.1} parent=39 // pred_region
        %s1853 = smul.u32 28, %s21
      $region44: #{tpu_custom_call.1} parent=39 // pred_fallthru
        _
    $region40: #{tpu_custom_call.1} parent=5 // pred_fallthru
      _
    %p1854 = scmp.le.s32.totalorder 2, %s11
    // Predicated region
    $region45: #{tpu_custom_call.1} parent=5 // pred_check
      %p1855 = pneg %p1854
    $region46: #{tpu_custom_call.1} parent=5 // pred_check_branch
      %1857 = sbr.rel (%p1855) target = $region48
    $region47: #{tpu_custom_call.1} parent=5 // pred_region
      %s1858 = ssub.s32 %s11, 2
      // Predicated region
      $region49: #{tpu_custom_call.1} parent=47 // pred_check
        %p1859 = pneg %p164
      $region50: #{tpu_custom_call.1} parent=47 // pred_check_branch
        %1861 = sbr.rel (%p1859) target = $region52
      $region51: #{tpu_custom_call.1} parent=47 // pred_region
        %s1862 = smul.u32 28, %s23
        %p1863 = scmp.lt.s32.totalorder %s22, 1
        %s1864 = scalar_select %p1863, %s22, 1
        %p1865 = scmp.lt.s32.totalorder %s1862, 27
        %s1866 = scalar_select %p1865, %s1862, 27
        %s1867 = smul.addr %s1864, 28
        %s1868 = sadd.s32 %s1866, %s1867
        %s1869 = smul.addr %s1868, 8
        %s1870 = scalar_lea.vmem %s5, %s1869
      $region52: #{tpu_custom_call.1} parent=47 // pred_fallthru
        _
    $region48: #{tpu_custom_call.1} parent=5 // pred_fallthru
      _
  $region6: #{tpu_custom_call.1} parent=0 // loop_footer
    %s15 = sadd.s32 1, %s11
  $region7: #{tpu_custom_call.1} parent=0 // loop_footer_branch
    %10 = sbr.rel target = $region3
  $region8: #{tpu_custom_call.1} parent=0 // loop_exit
    _

</llo_original>
